<compile_context>
chip_gen: v7x
topology: tpu7x:2x2x1
jax: 0.10.0
libtpu: 0.0.40
codegen_flags: <defaults>
</compile_context>

<pallas_src>
import numpy as np
import jax
import jax.numpy as jnp
from jax.experimental import pallas as pl
from jax.experimental.pallas import tpu as pltpu

WIN = 11
PAD = WIN // 2
SIGMA = 1.5
_C1 = 0.01 ** 2
_C2 = 0.03 ** 2


def _gaussian_1d():
    # Same construction as pytorch_ssim.gaussian(window_size=11, sigma=1.5).
    x = np.arange(WIN, dtype=np.float64)
    g = np.exp(-((x - WIN // 2) ** 2) / (2.0 * SIGMA ** 2))
    return (g / g.sum()).astype(np.float32)


def _band_matrix(n):
    """(n, n) banded Toeplitz matrix B with B[i, j] = g[j - i + PAD].

    blur_1d(x) with zero padding == B @ x (truncated border rows encode the
    conv2d zero pad).  B is symmetric because the Gaussian is symmetric.
    """
    g = _gaussian_1d()
    b = np.zeros((n, n), dtype=np.float32)
    for i in range(n):
        for j in range(max(0, i - PAD), min(n, i + PAD + 1)):
            b[i, j] = g[j - i + PAD]
    return b


def _fold(x):
    """Mostly-VPU partial reduction.

    Returns a (<=8, <=128) f32 array whose element sum equals sum(x).  Leading
    axes are summed as whole-slab VPU adds, rows are folded 8-at-a-time when
    divisible (layout-free reshape), and only a tiny (<=8 x cols) remainder
    ever goes through a cross-sublane / cross-lane reduce.
    """
    while x.ndim > 2:
        x = jnp.sum(x, axis=0)                      # VPU slab adds
    if x.ndim == 1:
        x = x.reshape(1, x.shape[0])
    r, c = x.shape
    if r > 8:
        if r % 8 == 0:
            x = jnp.sum(x.reshape(r // 8, 8, c), axis=0)   # VPU slab adds
        else:
            x = jnp.sum(x, axis=0, keepdims=True)          # small remainder
    if x.shape[1] > 128:
        x = jnp.sum(x, axis=1, keepdims=True)               # tiny (<=8 rows)
    return x


def _store_fold(out_ref, row, x):
    p = _fold(x)
    r, c = p.shape
    out_ref[0, row, 0:r, 0:c] = p


def _depth_loss_kernel(a_h_ref, a_w_ref, yt_ref, yp_ref, out_ref):
    tn, H, W = yt_ref.shape
    f32, bf16 = jnp.float32, jnp.bfloat16

    yt = yt_ref[...].astype(f32)          # (TN, H, W)
    yp = yp_ref[...].astype(f32)
    a_h = a_h_ref[...]                    # (H, H) bf16 band matrix (resident)
    a_w = a_w_ref[...]                    # (W, W) bf16 band matrix (resident)

    out_ref[0] = jnp.zeros((4, 8, 128), f32)

    # ---- l_depth / l_edges partials (rows 0, 1, 2) --------------------------
    # grad(pred) - grad(true) == grad(pred - true); zero-padded row/col of the
    # PyTorch gradients contributes 0 to the sum.
    d = yp - yt
    _store_fold(out_ref, 0, jnp.abs(d))
    _store_fold(out_ref, 1, jnp.abs(d[:, :, 1:] - d[:, :, :-1]))   # d/dx diff
    _store_fold(out_ref, 2, jnp.abs(d[:, 1:, :] - d[:, :-1, :]))   # d/dy diff

    # ---- SSIM partial (row 3): separable 11x11 gaussian blur on the MXU -----
    # blur(x) = A_h @ x @ A_w; both passes in bf16, f32 accumulation.
    # (bf16 operands trade ~1e-3-level SSIM accuracy for native MXU speed.)
    ops = (yp.astype(bf16), yt.astype(bf16),
           (yp * yp).astype(bf16), (yt * yt).astype(bf16),
           (yp * yt).astype(bf16))

    # W-pass: 5 independent (TN*H, W) @ (W, W) matmuls (no concat copy),
    # W stays in lanes, M = TN*H keeps the MXU fed.
    t = [jnp.dot(o.reshape(tn * H, W), a_w, preferred_element_type=f32)
             .astype(bf16).reshape(tn, H, W)
         for o in ops]

    # H-pass + SSIM epilogue per image: a_h @ t_i is a plain 2-D left-multiply
    # (contracts H, W stays in lanes) -> no slab transpose anywhere.
    ssim_acc = None
    for i in range(tn):
        mu1, mu2, m11, m22, m12 = (
            jnp.dot(a_h, tk[i], preferred_element_type=f32) for tk in t)
        mu1mu2 = mu1 * mu2
        mu1sq = mu1 * mu1
        mu2sq = mu2 * mu2
        num = (2.0 * mu1mu2 + _C1) * (2.0 * (m12 - mu1mu2) + _C2)
        den = (mu1sq + mu2sq + _C1) * ((m11 - mu1sq) + (m22 - mu2sq) + _C2)
        part = _fold(num * pl.reciprocal(den, approx=True))   # divide -> EUP
        ssim_acc = part if ssim_acc is None else ssim_acc + part
    r, c = ssim_acc.shape
    out_ref[0, 3, 0:r, 0:c] = ssim_acc


def _vmem_budget():
    """(working-set budget for tile sizing, vmem_limit_bytes), per generation."""
    cap = None
    try:
        cap = int(getattr(pltpu.get_tpu_info(), "vmem_capacity_bytes", 0)) or None
    except Exception:
        cap = None
    if not cap:
        cap = 64 * 1024 * 1024                 # conservative default (v7x/TC)
    budget = min(48 << 20, (cap * 5) // 16)    # ~20 MiB v7x, ~40 MiB v5e/v6e
    limit = min(96 << 20, (cap * 3) // 4)      # ~48 MiB v7x,  96 MiB v5e/v6e
    return budget, limit


def _pick_tile(N, H, W, in_itemsize, budget):
    """Images per grid step: big enough to amortize the ~0.35us per-step cost,
    small enough to fit the per-step working set in VMEM and keep >= 4 grid
    steps (>= 2 per TensorCore on v7x megacore) when N allows."""
    per_img = H * W * (
        2 * 2 * in_itemsize    # 2 double-buffered input blocks, native dtype
        + 5 * 2                # bf16 blur operand slabs
        + 5 * (4 + 2)          # W-pass f32 result + bf16 recast
        + 5 * 4                # per-image blurred maps (f32)
        + 6 * 4)               # d / |d| / gradient / ssim temporaries (f32)
    consts = 2 * 2 * (H * H + W * W)   # double-buffered bf16 band matrices
    cap = max(1, (budget - consts) // per_img)
    return int(max(1, min(cap, max(1, N // 4), 8)))


def _run_block(a_h, a_w, yt, yp, tn, vmem_limit):
    """One pallas_call over (n, H, W) image stacks with n % tn == 0."""
    n, H, W = yt.shape
    grid = n // tn
    img_spec = pl.BlockSpec((tn, H, W), lambda i: (i, 0, 0))
    return pl.pallas_call(
        _depth_loss_kernel,
        out_shape=jax.ShapeDtypeStruct((grid, 4, 8, 128), jnp.float32),
        grid_spec=pltpu.PrefetchScalarGridSpec(
            num_scalar_prefetch=0,
            grid=(grid,),
            in_specs=[pl.BlockSpec((H, H), lambda i: (0, 0)),   # resident const
                      pl.BlockSpec((W, W), lambda i: (0, 0)),   # resident const
                      img_spec, img_spec],
            out_specs=pl.BlockSpec((1, 4, 8, 128), lambda i: (i, 0, 0, 0)),
        ),
        compiler_params=pltpu.CompilerParams(
            dimension_semantics=("parallel",),
            vmem_limit_bytes=int(vmem_limit),
        ),
    )(a_h, a_w, yt, yp)


def depth_loss(y_true, y_pred, w1=1.0, w2=0.0, w3=0.1):
    """JAX/Pallas equivalent of DepthLoss.forward(y_true, y_pred)."""
    B, C, H, W = y_true.shape
    N = B * C
    yt = y_true.reshape(N, H, W)          # no wrapper-side pad / cast
    yp = y_pred.reshape(N, H, W)

    a_h = jnp.asarray(_band_matrix(H), dtype=jnp.bfloat16)
    a_w = jnp.asarray(_band_matrix(W), dtype=jnp.bfloat16)

    budget, vmem_limit = _vmem_budget()
    tn = _pick_tile(N, H, W, jnp.dtype(y_true.dtype).itemsize, budget)

    # TN need not divide N: the (< TN)-sized remainder gets its own exact
    # single-step call instead of collapsing TN to a poor divisor of N.
    n_main = (N // tn) * tn
    parts = [_run_block(a_h, a_w, yt[:n_main], yp[:n_main], tn, vmem_limit)]
    if n_main < N:
        parts.append(_run_block(a_h, a_w, yt[n_main:], yp[n_main:],
                                N - n_main, vmem_limit))

    # Tiny epilogue: finish the cross-lane reduce, normalize, clamp, combine.
    sums = sum(jnp.sum(p, axis=(0, 2, 3)) for p in parts)   # (4,) f32
    n_elems = jnp.float32(N * H * W)
    l_depth = sums[0] / n_elems                   # mean over (B, C, H, W)
    l_edges = (sums[1] + sums[2]) / n_elems       # mean over (B, C, H, W)
    ssim_mean = sums[3] / n_elems                 # SSIM(size_average=True)
    l_ssim = jnp.clip((1.0 - ssim_mean) * 0.5, 0.0, 1.0)
    return w1 * l_ssim + w2 * l_edges + w3 * l_depth


if __name__ == "__main__":
    key = jax.random.PRNGKey(0)
    k1, k2 = jax.random.split(key)
    B, C, H, W = 2, 4, 16, 16
    y_true = jax.random.uniform(k1, (B, C, H, W), dtype=jnp.float32)
    y_pred = jax.random.uniform(k2, (B, C, H, W), dtype=jnp.float32)

    loss = jax.jit(depth_loss)(y_true, y_pred)
    jax.block_until_ready(loss)
    print("KERNEL_OK")
</pallas_src>

<mosaic_0001>
module attributes {stable_mosaic.version = 11 : i64} {
  func.func @_depth_loss_kernel(%arg0: i32, %arg1: memref<16x16xbf16, #tpu.memory_space<vmem>>, %arg2: memref<16x16xbf16, #tpu.memory_space<vmem>>, %arg3: memref<2x16x16xf32, #tpu.memory_space<vmem>>, %arg4: memref<2x16x16xf32, #tpu.memory_space<vmem>>, %arg5: memref<1x4x8x128xf32, #tpu.memory_space<vmem>>) attributes {dimension_semantics = [#tpu.dimension_semantics<parallel>], iteration_bounds = array<i64: 4>, scalar_prefetch = 0 : i64, scratch_operands = 0 : i64, tpu.core_type = #tpu.core_type<tc>, window_params = [{pipeline_mode = #tpu.pipeline_mode<synchronous>, transform_indices = @transform_0, window_bounds = array<i64: 16, 16>}, {pipeline_mode = #tpu.pipeline_mode<synchronous>, transform_indices = @transform_1, window_bounds = array<i64: 16, 16>}, {transform_indices = @transform_2, window_bounds = array<i64: 2, 16, 16>}, {transform_indices = @transform_3, window_bounds = array<i64: 2, 16, 16>}, {transform_indices = @transform_4, window_bounds = array<i64: 1, 4, 8, 128>}]} {
    %c0 = arith.constant 0 : index
    %c0_0 = arith.constant 0 : index
    %c0_1 = arith.constant 0 : index
    %0 = vector.load %arg3[%c0, %c0_0, %c0_1] : memref<2x16x16xf32, #tpu.memory_space<vmem>>, vector<2x16x16xf32>
    %c0_2 = arith.constant 0 : index
    %c0_3 = arith.constant 0 : index
    %c0_4 = arith.constant 0 : index
    %1 = vector.load %arg4[%c0_2, %c0_3, %c0_4] : memref<2x16x16xf32, #tpu.memory_space<vmem>>, vector<2x16x16xf32>
    %c0_5 = arith.constant 0 : index
    %c0_6 = arith.constant 0 : index
    %2 = vector.load %arg1[%c0_5, %c0_6] : memref<16x16xbf16, #tpu.memory_space<vmem>>, vector<16x16xbf16>
    %c0_7 = arith.constant 0 : index
    %c0_8 = arith.constant 0 : index
    %3 = vector.load %arg2[%c0_7, %c0_8] : memref<16x16xbf16, #tpu.memory_space<vmem>>, vector<16x16xbf16>
    %cst = arith.constant 0.000000e+00 : f32
    %4 = vector.broadcast %cst : f32 to vector<4x8x128xf32>
    %c0_9 = arith.constant 0 : index
    %c0_10 = arith.constant 0 : index
    %c0_11 = arith.constant 0 : index
    %c0_12 = arith.constant 0 : index
    %5 = vector.load %arg5[%c0_9, %c0_10, %c0_11, %c0_12] : memref<1x4x8x128xf32, #tpu.memory_space<vmem>>, vector<1x4x8x128xf32>
    %6 = vector.shape_cast %5 : vector<1x4x8x128xf32> to vector<4x8x128xf32>
    %7 = vector.shape_cast %4 : vector<4x8x128xf32> to vector<1x4x8x128xf32>
    tpu.vector_store %arg5[%c0_9, %c0_10, %c0_11, %c0_12], %7 {strides = array<i32>} : memref<1x4x8x128xf32, #tpu.memory_space<vmem>>, vector<1x4x8x128xf32>,
    %8 = arith.subf %1, %0 : vector<2x16x16xf32>
    %9 = math.absf %8 : vector<2x16x16xf32>
    %cst_13 = arith.constant dense<0.000000e+00> : vector<16x16xf32>
    %10 = vector.multi_reduction <add>, %9, %cst_13 [0] : vector<2x16x16xf32> to vector<16x16xf32>
    %11 = vector.shape_cast %10 : vector<16x16xf32> to vector<2x8x16xf32>
    %cst_14 = arith.constant dense<0.000000e+00> : vector<8x16xf32>
    %12 = vector.multi_reduction <add>, %11, %cst_14 [0] : vector<2x8x16xf32> to vector<8x16xf32>
    %c0_15 = arith.constant 0 : index
    %c0_16 = arith.constant 0 : index
    %c0_17 = arith.constant 0 : index
    %c0_18 = arith.constant 0 : index
    %13 = vector.load %arg5[%c0_15, %c0_16, %c0_17, %c0_18] : memref<1x4x8x128xf32, #tpu.memory_space<vmem>>, vector<1x1x8x16xf32>
    %14 = vector.shape_cast %13 : vector<1x1x8x16xf32> to vector<8x16xf32>
    %15 = vector.shape_cast %12 : vector<8x16xf32> to vector<1x1x8x16xf32>
    tpu.vector_store %arg5[%c0_15, %c0_16, %c0_17, %c0_18], %15 {strides = array<i32>} : memref<1x4x8x128xf32, #tpu.memory_space<vmem>>, vector<1x1x8x16xf32>,
    %16 = vector.extract_strided_slice %8 {offsets = [0, 0, 1], sizes = [2, 16, 15], strides = [1, 1, 1]} : vector<2x16x16xf32> to vector<2x16x15xf32>
    %17 = vector.extract_strided_slice %8 {offsets = [0, 0, 0], sizes = [2, 16, 15], strides = [1, 1, 1]} : vector<2x16x16xf32> to vector<2x16x15xf32>
    %18 = arith.subf %16, %17 : vector<2x16x15xf32>
    %19 = math.absf %18 : vector<2x16x15xf32>
    %cst_19 = arith.constant dense<0.000000e+00> : vector<16x15xf32>
    %20 = vector.multi_reduction <add>, %19, %cst_19 [0] : vector<2x16x15xf32> to vector<16x15xf32>
    %21 = vector.shape_cast %20 : vector<16x15xf32> to vector<2x8x15xf32>
    %cst_20 = arith.constant dense<0.000000e+00> : vector<8x15xf32>
    %22 = vector.multi_reduction <add>, %21, %cst_20 [0] : vector<2x8x15xf32> to vector<8x15xf32>
    %c0_21 = arith.constant 0 : index
    %c1 = arith.constant 1 : index
    %c0_22 = arith.constant 0 : index
    %c0_23 = arith.constant 0 : index
    %23 = vector.load %arg5[%c0_21, %c1, %c0_22, %c0_23] : memref<1x4x8x128xf32, #tpu.memory_space<vmem>>, vector<1x1x8x15xf32>
    %24 = vector.shape_cast %23 : vector<1x1x8x15xf32> to vector<8x15xf32>
    %25 = vector.shape_cast %22 : vector<8x15xf32> to vector<1x1x8x15xf32>
    tpu.vector_store %arg5[%c0_21, %c1, %c0_22, %c0_23], %25 {strides = array<i32>} : memref<1x4x8x128xf32, #tpu.memory_space<vmem>>, vector<1x1x8x15xf32>,
    %26 = vector.extract_strided_slice %8 {offsets = [0, 1, 0], sizes = [2, 15, 16], strides = [1, 1, 1]} : vector<2x16x16xf32> to vector<2x15x16xf32>
    %27 = vector.extract_strided_slice %8 {offsets = [0, 0, 0], sizes = [2, 15, 16], strides = [1, 1, 1]} : vector<2x16x16xf32> to vector<2x15x16xf32>
    %28 = arith.subf %26, %27 : vector<2x15x16xf32>
    %29 = math.absf %28 : vector<2x15x16xf32>
    %cst_24 = arith.constant dense<0.000000e+00> : vector<15x16xf32>
    %30 = vector.multi_reduction <add>, %29, %cst_24 [0] : vector<2x15x16xf32> to vector<15x16xf32>
    %cst_25 = arith.constant dense<0.000000e+00> : vector<16xf32>
    %31 = vector.multi_reduction <add>, %30, %cst_25 [0] : vector<15x16xf32> to vector<16xf32>
    %32 = vector.shape_cast %31 : vector<16xf32> to vector<1x16xf32>
    %c0_26 = arith.constant 0 : index
    %c2 = arith.constant 2 : index
    %c0_27 = arith.constant 0 : index
    %c0_28 = arith.constant 0 : index
    %33 = vector.load %arg5[%c0_26, %c2, %c0_27, %c0_28] : memref<1x4x8x128xf32, #tpu.memory_space<vmem>>, vector<1x1x1x16xf32>
    %34 = vector.shape_cast %33 : vector<1x1x1x16xf32> to vector<1x16xf32>
    %35 = vector.shape_cast %32 : vector<1x16xf32> to vector<1x1x1x16xf32>
    tpu.vector_store %arg5[%c0_26, %c2, %c0_27, %c0_28], %35 {strides = array<i32>} : memref<1x4x8x128xf32, #tpu.memory_space<vmem>>, vector<1x1x1x16xf32>,
    %36 = arith.truncf %1 : vector<2x16x16xf32> to vector<2x16x16xbf16>
    %37 = arith.truncf %0 : vector<2x16x16xf32> to vector<2x16x16xbf16>
    %38 = arith.mulf %1, %1 : vector<2x16x16xf32>
    %39 = arith.truncf %38 : vector<2x16x16xf32> to vector<2x16x16xbf16>
    %40 = arith.mulf %0, %0 : vector<2x16x16xf32>
    %41 = arith.truncf %40 : vector<2x16x16xf32> to vector<2x16x16xbf16>
    %42 = arith.mulf %1, %0 : vector<2x16x16xf32>
    %43 = arith.truncf %42 : vector<2x16x16xf32> to vector<2x16x16xbf16>
    %44 = vector.shape_cast %36 : vector<2x16x16xbf16> to vector<32x16xbf16>
    %cst_29 = arith.constant dense<0.000000e+00> : vector<32x16xf32>
    %45 = tpu.matmul %44, %3, %cst_29 {dimension_numbers = #tpu.dot_dimension_numbers<[1], [0], [0], [1], [0, 0, 1, 1], [], []>} : vector<32x16xbf16>, vector<16x16xbf16>, vector<32x16xf32> -> vector<32x16xf32>
    %46 = arith.truncf %45 : vector<32x16xf32> to vector<32x16xbf16>
    %47 = vector.shape_cast %46 : vector<32x16xbf16> to vector<2x16x16xbf16>
    %48 = vector.shape_cast %37 : vector<2x16x16xbf16> to vector<32x16xbf16>
    %cst_30 = arith.constant dense<0.000000e+00> : vector<32x16xf32>
    %49 = tpu.matmul %48, %3, %cst_30 {dimension_numbers = #tpu.dot_dimension_numbers<[1], [0], [0], [1], [0, 0, 1, 1], [], []>} : vector<32x16xbf16>, vector<16x16xbf16>, vector<32x16xf32> -> vector<32x16xf32>
    %50 = arith.truncf %49 : vector<32x16xf32> to vector<32x16xbf16>
    %51 = vector.shape_cast %50 : vector<32x16xbf16> to vector<2x16x16xbf16>
    %52 = vector.shape_cast %39 : vector<2x16x16xbf16> to vector<32x16xbf16>
    %cst_31 = arith.constant dense<0.000000e+00> : vector<32x16xf32>
    %53 = tpu.matmul %52, %3, %cst_31 {dimension_numbers = #tpu.dot_dimension_numbers<[1], [0], [0], [1], [0, 0, 1, 1], [], []>} : vector<32x16xbf16>, vector<16x16xbf16>, vector<32x16xf32> -> vector<32x16xf32>
    %54 = arith.truncf %53 : vector<32x16xf32> to vector<32x16xbf16>
    %55 = vector.shape_cast %54 : vector<32x16xbf16> to vector<2x16x16xbf16>
    %56 = vector.shape_cast %41 : vector<2x16x16xbf16> to vector<32x16xbf16>
    %cst_32 = arith.constant dense<0.000000e+00> : vector<32x16xf32>
    %57 = tpu.matmul %56, %3, %cst_32 {dimension_numbers = #tpu.dot_dimension_numbers<[1], [0], [0], [1], [0, 0, 1, 1], [], []>} : vector<32x16xbf16>, vector<16x16xbf16>, vector<32x16xf32> -> vector<32x16xf32>
    %58 = arith.truncf %57 : vector<32x16xf32> to vector<32x16xbf16>
    %59 = vector.shape_cast %58 : vector<32x16xbf16> to vector<2x16x16xbf16>
    %60 = vector.shape_cast %43 : vector<2x16x16xbf16> to vector<32x16xbf16>
    %cst_33 = arith.constant dense<0.000000e+00> : vector<32x16xf32>
    %61 = tpu.matmul %60, %3, %cst_33 {dimension_numbers = #tpu.dot_dimension_numbers<[1], [0], [0], [1], [0, 0, 1, 1], [], []>} : vector<32x16xbf16>, vector<16x16xbf16>, vector<32x16xf32> -> vector<32x16xf32>
    %62 = arith.truncf %61 : vector<32x16xf32> to vector<32x16xbf16>
    %63 = vector.shape_cast %62 : vector<32x16xbf16> to vector<2x16x16xbf16>
    %64 = vector.extract_strided_slice %47 {offsets = [0, 0, 0], sizes = [1, 16, 16], strides = [1, 1, 1]} : vector<2x16x16xbf16> to vector<1x16x16xbf16>
    %65 = vector.shape_cast %64 : vector<1x16x16xbf16> to vector<16x16xbf16>
    %cst_34 = arith.constant dense<0.000000e+00> : vector<16x16xf32>
    %66 = tpu.matmul %2, %65, %cst_34 {dimension_numbers = #tpu.dot_dimension_numbers<[1], [0], [0], [1], [0, 0, 1, 1], [], []>} : vector<16x16xbf16>, vector<16x16xbf16>, vector<16x16xf32> -> vector<16x16xf32>
    %67 = vector.extract_strided_slice %51 {offsets = [0, 0, 0], sizes = [1, 16, 16], strides = [1, 1, 1]} : vector<2x16x16xbf16> to vector<1x16x16xbf16>
    %68 = vector.shape_cast %67 : vector<1x16x16xbf16> to vector<16x16xbf16>
    %cst_35 = arith.constant dense<0.000000e+00> : vector<16x16xf32>
    %69 = tpu.matmul %2, %68, %cst_35 {dimension_numbers = #tpu.dot_dimension_numbers<[1], [0], [0], [1], [0, 0, 1, 1], [], []>} : vector<16x16xbf16>, vector<16x16xbf16>, vector<16x16xf32> -> vector<16x16xf32>
    %70 = vector.extract_strided_slice %55 {offsets = [0, 0, 0], sizes = [1, 16, 16], strides = [1, 1, 1]} : vector<2x16x16xbf16> to vector<1x16x16xbf16>
    %71 = vector.shape_cast %70 : vector<1x16x16xbf16> to vector<16x16xbf16>
    %cst_36 = arith.constant dense<0.000000e+00> : vector<16x16xf32>
    %72 = tpu.matmul %2, %71, %cst_36 {dimension_numbers = #tpu.dot_dimension_numbers<[1], [0], [0], [1], [0, 0, 1, 1], [], []>} : vector<16x16xbf16>, vector<16x16xbf16>, vector<16x16xf32> -> vector<16x16xf32>
    %73 = vector.extract_strided_slice %59 {offsets = [0, 0, 0], sizes = [1, 16, 16], strides = [1, 1, 1]} : vector<2x16x16xbf16> to vector<1x16x16xbf16>
    %74 = vector.shape_cast %73 : vector<1x16x16xbf16> to vector<16x16xbf16>
    %cst_37 = arith.constant dense<0.000000e+00> : vector<16x16xf32>
    %75 = tpu.matmul %2, %74, %cst_37 {dimension_numbers = #tpu.dot_dimension_numbers<[1], [0], [0], [1], [0, 0, 1, 1], [], []>} : vector<16x16xbf16>, vector<16x16xbf16>, vector<16x16xf32> -> vector<16x16xf32>
    %76 = vector.extract_strided_slice %63 {offsets = [0, 0, 0], sizes = [1, 16, 16], strides = [1, 1, 1]} : vector<2x16x16xbf16> to vector<1x16x16xbf16>
    %77 = vector.shape_cast %76 : vector<1x16x16xbf16> to vector<16x16xbf16>
    %cst_38 = arith.constant dense<0.000000e+00> : vector<16x16xf32>
    %78 = tpu.matmul %2, %77, %cst_38 {dimension_numbers = #tpu.dot_dimension_numbers<[1], [0], [0], [1], [0, 0, 1, 1], [], []>} : vector<16x16xbf16>, vector<16x16xbf16>, vector<16x16xf32> -> vector<16x16xf32>
    %79 = arith.mulf %66, %69 : vector<16x16xf32>
    %80 = arith.mulf %66, %66 : vector<16x16xf32>
    %81 = arith.mulf %69, %69 : vector<16x16xf32>
    %cst_39 = arith.constant 2.000000e+00 : f32
    %82 = vector.broadcast %cst_39 : f32 to vector<16x16xf32>
    %83 = arith.mulf %82, %79 : vector<16x16xf32>
    %cst_40 = arith.constant 9.99999974E-5 : f32
    %84 = vector.broadcast %cst_40 : f32 to vector<16x16xf32>
    %85 = arith.addf %83, %84 : vector<16x16xf32>
    %86 = arith.subf %78, %79 : vector<16x16xf32>
    %cst_41 = arith.constant 2.000000e+00 : f32
    %87 = vector.broadcast %cst_41 : f32 to vector<16x16xf32>
    %88 = arith.mulf %87, %86 : vector<16x16xf32>
    %cst_42 = arith.constant 8.99999984E-4 : f32
    %89 = vector.broadcast %cst_42 : f32 to vector<16x16xf32>
    %90 = arith.addf %88, %89 : vector<16x16xf32>
    %91 = arith.mulf %85, %90 : vector<16x16xf32>
    %92 = arith.addf %80, %81 : vector<16x16xf32>
    %cst_43 = arith.constant 9.99999974E-5 : f32
    %93 = vector.broadcast %cst_43 : f32 to vector<16x16xf32>
    %94 = arith.addf %92, %93 : vector<16x16xf32>
    %95 = arith.subf %72, %80 : vector<16x16xf32>
    %96 = arith.subf %75, %81 : vector<16x16xf32>
    %97 = arith.addf %95, %96 : vector<16x16xf32>
    %cst_44 = arith.constant 8.99999984E-4 : f32
    %98 = vector.broadcast %cst_44 : f32 to vector<16x16xf32>
    %99 = arith.addf %97, %98 : vector<16x16xf32>
    %100 = arith.mulf %94, %99 : vector<16x16xf32>
    %101 = tpu.reciprocal %100 {approx = true} : vector<16x16xf32> -> vector<16x16xf32>
    %102 = arith.mulf %91, %101 : vector<16x16xf32>
    %103 = vector.shape_cast %102 : vector<16x16xf32> to vector<2x8x16xf32>
    %cst_45 = arith.constant dense<0.000000e+00> : vector<8x16xf32>
    %104 = vector.multi_reduction <add>, %103, %cst_45 [0] : vector<2x8x16xf32> to vector<8x16xf32>
    %105 = vector.extract_strided_slice %47 {offsets = [1, 0, 0], sizes = [1, 16, 16], strides = [1, 1, 1]} : vector<2x16x16xbf16> to vector<1x16x16xbf16>
    %106 = vector.shape_cast %105 : vector<1x16x16xbf16> to vector<16x16xbf16>
    %cst_46 = arith.constant dense<0.000000e+00> : vector<16x16xf32>
    %107 = tpu.matmul %2, %106, %cst_46 {dimension_numbers = #tpu.dot_dimension_numbers<[1], [0], [0], [1], [0, 0, 1, 1], [], []>} : vector<16x16xbf16>, vector<16x16xbf16>, vector<16x16xf32> -> vector<16x16xf32>
    %108 = vector.extract_strided_slice %51 {offsets = [1, 0, 0], sizes = [1, 16, 16], strides = [1, 1, 1]} : vector<2x16x16xbf16> to vector<1x16x16xbf16>
    %109 = vector.shape_cast %108 : vector<1x16x16xbf16> to vector<16x16xbf16>
    %cst_47 = arith.constant dense<0.000000e+00> : vector<16x16xf32>
    %110 = tpu.matmul %2, %109, %cst_47 {dimension_numbers = #tpu.dot_dimension_numbers<[1], [0], [0], [1], [0, 0, 1, 1], [], []>} : vector<16x16xbf16>, vector<16x16xbf16>, vector<16x16xf32> -> vector<16x16xf32>
    %111 = vector.extract_strided_slice %55 {offsets = [1, 0, 0], sizes = [1, 16, 16], strides = [1, 1, 1]} : vector<2x16x16xbf16> to vector<1x16x16xbf16>
    %112 = vector.shape_cast %111 : vector<1x16x16xbf16> to vector<16x16xbf16>
    %cst_48 = arith.constant dense<0.000000e+00> : vector<16x16xf32>
    %113 = tpu.matmul %2, %112, %cst_48 {dimension_numbers = #tpu.dot_dimension_numbers<[1], [0], [0], [1], [0, 0, 1, 1], [], []>} : vector<16x16xbf16>, vector<16x16xbf16>, vector<16x16xf32> -> vector<16x16xf32>
    %114 = vector.extract_strided_slice %59 {offsets = [1, 0, 0], sizes = [1, 16, 16], strides = [1, 1, 1]} : vector<2x16x16xbf16> to vector<1x16x16xbf16>
    %115 = vector.shape_cast %114 : vector<1x16x16xbf16> to vector<16x16xbf16>
    %cst_49 = arith.constant dense<0.000000e+00> : vector<16x16xf32>
    %116 = tpu.matmul %2, %115, %cst_49 {dimension_numbers = #tpu.dot_dimension_numbers<[1], [0], [0], [1], [0, 0, 1, 1], [], []>} : vector<16x16xbf16>, vector<16x16xbf16>, vector<16x16xf32> -> vector<16x16xf32>
    %117 = vector.extract_strided_slice %63 {offsets = [1, 0, 0], sizes = [1, 16, 16], strides = [1, 1, 1]} : vector<2x16x16xbf16> to vector<1x16x16xbf16>
    %118 = vector.shape_cast %117 : vector<1x16x16xbf16> to vector<16x16xbf16>
    %cst_50 = arith.constant dense<0.000000e+00> : vector<16x16xf32>
    %119 = tpu.matmul %2, %118, %cst_50 {dimension_numbers = #tpu.dot_dimension_numbers<[1], [0], [0], [1], [0, 0, 1, 1], [], []>} : vector<16x16xbf16>, vector<16x16xbf16>, vector<16x16xf32> -> vector<16x16xf32>
    %120 = arith.mulf %107, %110 : vector<16x16xf32>
    %121 = arith.mulf %107, %107 : vector<16x16xf32>
    %122 = arith.mulf %110, %110 : vector<16x16xf32>
    %cst_51 = arith.constant 2.000000e+00 : f32
    %123 = vector.broadcast %cst_51 : f32 to vector<16x16xf32>
    %124 = arith.mulf %123, %120 : vector<16x16xf32>
    %cst_52 = arith.constant 9.99999974E-5 : f32
    %125 = vector.broadcast %cst_52 : f32 to vector<16x16xf32>
    %126 = arith.addf %124, %125 : vector<16x16xf32>
    %127 = arith.subf %119, %120 : vector<16x16xf32>
    %cst_53 = arith.constant 2.000000e+00 : f32
    %128 = vector.broadcast %cst_53 : f32 to vector<16x16xf32>
    %129 = arith.mulf %128, %127 : vector<16x16xf32>
    %cst_54 = arith.constant 8.99999984E-4 : f32
    %130 = vector.broadcast %cst_54 : f32 to vector<16x16xf32>
    %131 = arith.addf %129, %130 : vector<16x16xf32>
    %132 = arith.mulf %126, %131 : vector<16x16xf32>
    %133 = arith.addf %121, %122 : vector<16x16xf32>
    %cst_55 = arith.constant 9.99999974E-5 : f32
    %134 = vector.broadcast %cst_55 : f32 to vector<16x16xf32>
    %135 = arith.addf %133, %134 : vector<16x16xf32>
    %136 = arith.subf %113, %121 : vector<16x16xf32>
    %137 = arith.subf %116, %122 : vector<16x16xf32>
    %138 = arith.addf %136, %137 : vector<16x16xf32>
    %cst_56 = arith.constant 8.99999984E-4 : f32
    %139 = vector.broadcast %cst_56 : f32 to vector<16x16xf32>
    %140 = arith.addf %138, %139 : vector<16x16xf32>
    %141 = arith.mulf %135, %140 : vector<16x16xf32>
    %142 = tpu.reciprocal %141 {approx = true} : vector<16x16xf32> -> vector<16x16xf32>
    %143 = arith.mulf %132, %142 : vector<16x16xf32>
    %144 = vector.shape_cast %143 : vector<16x16xf32> to vector<2x8x16xf32>
    %cst_57 = arith.constant dense<0.000000e+00> : vector<8x16xf32>
    %145 = vector.multi_reduction <add>, %144, %cst_57 [0] : vector<2x8x16xf32> to vector<8x16xf32>
    %146 = arith.addf %104, %145 : vector<8x16xf32>
    %c0_58 = arith.constant 0 : index
    %c3 = arith.constant 3 : index
    %c0_59 = arith.constant 0 : index
    %c0_60 = arith.constant 0 : index
    %147 = vector.load %arg5[%c0_58, %c3, %c0_59, %c0_60] : memref<1x4x8x128xf32, #tpu.memory_space<vmem>>, vector<1x1x8x16xf32>
    %148 = vector.shape_cast %147 : vector<1x1x8x16xf32> to vector<8x16xf32>
    %149 = vector.shape_cast %146 : vector<8x16xf32> to vector<1x1x8x16xf32>
    tpu.vector_store %arg5[%c0_58, %c3, %c0_59, %c0_60], %149 {strides = array<i32>} : memref<1x4x8x128xf32, #tpu.memory_space<vmem>>, vector<1x1x8x16xf32>,
    return
  }
  func.func @transform_0(%arg0: i32) -> (i32, i32) {
    %c0_i32 = arith.constant 0 : i32
    %c0_i32_0 = arith.constant 0 : i32
    %c0_i32_1 = arith.constant 0 : i32
    return %c0_i32, %c0_i32_0 : i32, i32
  }
  func.func @transform_1(%arg0: i32) -> (i32, i32) {
    %c0_i32 = arith.constant 0 : i32
    %c0_i32_0 = arith.constant 0 : i32
    %c0_i32_1 = arith.constant 0 : i32
    return %c0_i32, %c0_i32_0 : i32, i32
  }
  func.func @transform_2(%arg0: i32) -> (i32, i32, i32) {
    %c0_i32 = arith.constant 0 : i32
    %c0_i32_0 = arith.constant 0 : i32
    %c0_i32_1 = arith.constant 0 : i32
    return %arg0, %c0_i32, %c0_i32_0 : i32, i32, i32
  }
  func.func @transform_3(%arg0: i32) -> (i32, i32, i32) {
    %c0_i32 = arith.constant 0 : i32
    %c0_i32_0 = arith.constant 0 : i32
    %c0_i32_1 = arith.constant 0 : i32
    return %arg0, %c0_i32, %c0_i32_0 : i32, i32, i32
  }
  func.func @transform_4(%arg0: i32) -> (i32, i32, i32, i32) {
    %c0_i32 = arith.constant 0 : i32
    %c0_i32_0 = arith.constant 0 : i32
    %c0_i32_1 = arith.constant 0 : i32
    %c0_i32_2 = arith.constant 0 : i32
    return %arg0, %c0_i32, %c0_i32_0, %c0_i32_1 : i32, i32, i32, i32
  }
}

</mosaic_0001>

<llo_original>
// kernel: depth_loss.1
$region0: #{depth_loss.1}
  #allocation0 [shape = 'u32[]', space=smem, size = 0x4, offset = 0x4, fixed_abs, tag = 'smem constant byte address 0x4 - core index']
  #allocation1 [shape = 'u32[144,128]{1,0:T(1,128)}', space=vmem, size = 0x12000, scoped, tag = 'internal scratch']
  %s0 = inlined_call_operand.vmem [shape: bf16[16,16], index: 0, kind: input, shape index: {}, may-alias: {0,1}]
  %s1 = inlined_call_operand.vmem [shape: bf16[16,16], index: 1, kind: input, shape index: {}, may-alias: {0,1}]
  %s2 = inlined_call_operand.hbm [shape: f32[8,16,16], index: 2, kind: input, shape index: {}]
  %s3 = inlined_call_operand.hbm [shape: f32[8,16,16], index: 3, kind: input, shape index: {}]
  %s4 = inlined_call_operand.vmem [shape: f32[4,4,8,128], index: 4, kind: output, shape index: {}]
  %s5 = sld [smem:[#allocation0]]
  $region57: #{depth_loss.1} parent=0
    _
  %s7 = ssub.s32 1, %s5
  %s8 = scalar_select 0, %s7, %s5
  $region1: #{depth_loss.1} parent=0
    #allocation2 [shape = 'u8[32768]{0}', space=vmem, size = 0x8000, scoped, tag = 'input window, operand 2']
    #allocation3 [shape = 's32[2]{0}', space=sflag, size = 0x8, scoped, tag = 'scoped memory for depth_loss.1']
    #allocation4 [shape = 'u8[32768]{0}', space=vmem, size = 0x8000, scoped, tag = 'input window, operand 3']
    #allocation5 [shape = 's32[2]{0}', space=sflag, size = 0x8, scoped, tag = 'scoped memory for depth_loss.1']
    %9 = vsyncpa [#allocation3], 0
    %s10 = scalar_lea.sflag [#allocation3], 1
    %11 = vsyncpa %s10, 0
    %12 = vsyncpa [#allocation5], 0
    %s13 = scalar_lea.sflag [#allocation5], 1
    %14 = vsyncpa %s13, 0
    loop: start=0, step=1, limit=6
    $region2: #{depth_loss.1} parent=1 // loop_pre_header
      _
    $region3: #{depth_loss.1} parent=1 // loop_header
      %s16 = sphi 0, %s20
      %p17 = scmp.ge.s32.totalorder %s16, 6
      %s24 = sphi 0, %s24
      %s26 = sphi 0, %s24
      %s27 = sphi 0, %s26
      %s41 = sphi 0, %s27
      %s45 = sphi 0, %s45
      %s47 = sphi 0, %s45
      %s48 = sphi 0, %s47
      %s62 = sphi 0, %s48
      %s68 = sphi 0, %s70
      %s71 = sphi 0, %s68
      %s72 = sphi 0, %s71
      %s88 = sphi 0, %s72
      %s94 = sphi 0, %s96
      %s97 = sphi 0, %s94
      %s98 = sphi 0, %s97
      %s114 = sphi 0, %s98
      %s120 = sphi 0, %s122
      %s123 = sphi 0, %s120
      %s124 = sphi 0, %s123
      %s140 = sphi 0, %s124
    $region4: #{depth_loss.1} parent=1 // loop_header_branch
      %19 = sbr.rel (%p17) target = $region8
    $region5: #{depth_loss.1} parent=1 // loop_body
      %s21 = ssub.s32 %s16, 1
      %s22 = ssub.s32 %s16, 2
      %s23 = sadd.s32 %s16, 1
      %s25 = sadd.s32 %s24, 1
      %p28 = scmp.eq.s32.totalorder %s16, 3
      %p29 = scmp.ne.s32.totalorder %s24, %s26
      %p30 = scmp.eq.s32.totalorder %s16, 0
      %p31 = por %p29, %p30
      %p32 = scmp.ne.s32.totalorder %s24, %s26
      %p33 = scmp.eq.s32.totalorder %s21, 3
      %p34 = por %p32, %p33
      %p35 = scmp.ne.s32.totalorder %s26, %s27
      %p36 = scmp.eq.s32.totalorder %s21, 0
      %p37 = por %p35, %p36
      %p38 = scmp.ne.s32.totalorder %s26, %s27
      %p39 = scmp.eq.s32.totalorder %s22, 3
      %p40 = por %p38, %p39
      %p42 = scmp.ne.s32.totalorder %s27, %s41
      %p43 = scmp.eq.s32.totalorder %s22, 0
      %p44 = por %p42, %p43
      %s46 = sadd.s32 %s45, 1
      %p49 = scmp.eq.s32.totalorder %s16, 3
      %p50 = scmp.ne.s32.totalorder %s45, %s47
      %p51 = scmp.eq.s32.totalorder %s16, 0
      %p52 = por %p50, %p51
      %p53 = scmp.ne.s32.totalorder %s45, %s47
      %p54 = scmp.eq.s32.totalorder %s21, 3
      %p55 = por %p53, %p54
      %p56 = scmp.ne.s32.totalorder %s47, %s48
      %p57 = scmp.eq.s32.totalorder %s21, 0
      %p58 = por %p56, %p57
      %p59 = scmp.ne.s32.totalorder %s47, %s48
      %p60 = scmp.eq.s32.totalorder %s22, 3
      %p61 = por %p59, %p60
      %p63 = scmp.ne.s32.totalorder %s48, %s62
      %p64 = scmp.eq.s32.totalorder %s22, 0
      %p65 = por %p63, %p64
      %s66 = ssub.s32 %s16, %s23
      %p67 = scmp.eq.s32.totalorder %s66, 0
      %s69 = sadd.s32 %s68, 1
      %s70 = scalar_select %p67, %s68, %s69
      %p73 = pneg %p67
      %p74 = scmp.eq.s32.totalorder %s16, 3
      %p75 = por %p73, %p74
      %p76 = scmp.ne.s32.totalorder %s68, %s71
      %p77 = scmp.eq.s32.totalorder %s16, 0
      %p78 = por %p76, %p77
      %p79 = scmp.ne.s32.totalorder %s68, %s71
      %p80 = scmp.eq.s32.totalorder %s21, 3
      %p81 = por %p79, %p80
      %p82 = scmp.ne.s32.totalorder %s71, %s72
      %p83 = scmp.eq.s32.totalorder %s21, 0
      %p84 = por %p82, %p83
      %p85 = scmp.ne.s32.totalorder %s71, %s72
      %p86 = scmp.eq.s32.totalorder %s22, 3
      %p87 = por %p85, %p86
      %p89 = scmp.ne.s32.totalorder %s72, %s88
      %p90 = scmp.eq.s32.totalorder %s22, 0
      %p91 = por %p89, %p90
      %s92 = ssub.s32 %s16, %s23
      %p93 = scmp.eq.s32.totalorder %s92, 0
      %s95 = sadd.s32 %s94, 1
      %s96 = scalar_select %p93, %s94, %s95
      %p99 = pneg %p93
      %p100 = scmp.eq.s32.totalorder %s16, 3
      %p101 = por %p99, %p100
      %p102 = scmp.ne.s32.totalorder %s94, %s97
      %p103 = scmp.eq.s32.totalorder %s16, 0
      %p104 = por %p102, %p103
      %p105 = scmp.ne.s32.totalorder %s94, %s97
      %p106 = scmp.eq.s32.totalorder %s21, 3
      %p107 = por %p105, %p106
      %p108 = scmp.ne.s32.totalorder %s97, %s98
      %p109 = scmp.eq.s32.totalorder %s21, 0
      %p110 = por %p108, %p109
      %p111 = scmp.ne.s32.totalorder %s97, %s98
      %p112 = scmp.eq.s32.totalorder %s22, 3
      %p113 = por %p111, %p112
      %p115 = scmp.ne.s32.totalorder %s98, %s114
      %p116 = scmp.eq.s32.totalorder %s22, 0
      %p117 = por %p115, %p116
      %s118 = ssub.s32 %s16, %s23
      %p119 = scmp.eq.s32.totalorder %s118, 0
      %s121 = sadd.s32 %s120, 1
      %s122 = scalar_select %p119, %s120, %s121
      %p125 = pneg %p119
      %p126 = scmp.eq.s32.totalorder %s16, 3
      %p127 = por %p125, %p126
      %p128 = scmp.ne.s32.totalorder %s120, %s123
      %p129 = scmp.eq.s32.totalorder %s16, 0
      %p130 = por %p128, %p129
      %p131 = scmp.ne.s32.totalorder %s120, %s123
      %p132 = scmp.eq.s32.totalorder %s21, 3
      %p133 = por %p131, %p132
      %p134 = scmp.ne.s32.totalorder %s123, %s124
      %p135 = scmp.eq.s32.totalorder %s21, 0
      %p136 = por %p134, %p135
      %p137 = scmp.ne.s32.totalorder %s123, %s124
      %p138 = scmp.eq.s32.totalorder %s22, 3
      %p139 = por %p137, %p138
      %p141 = scmp.ne.s32.totalorder %s124, %s140
      %p142 = scmp.eq.s32.totalorder %s22, 0
      %p143 = por %p141, %p142
      %p144 = scmp.le.s32.totalorder 1, %s16
      %p145 = scmp.lt.s32.totalorder %s16, 5
      %p146 = pnand %p144, %p145
      %p147 = pneg %p146
      // Predicated region
      $region9: #{depth_loss.1} parent=5 // pred_check
        _
      $region10: #{depth_loss.1} parent=5 // pred_check_branch
        %149 = sbr.rel (%p146) target = $region12
      $region11: #{depth_loss.1} parent=5 // pred_region
        %s150 = ssub.s32 %s16, 1
        // Predicated region
        $region13: #{depth_loss.1} parent=11 // pred_check
          %p151 = pneg %p37
        $region14: #{depth_loss.1} parent=11 // pred_check_branch
          %153 = sbr.rel (%p151) target = $region16
        $region15: #{depth_loss.1} parent=11 // pred_region
          _
        $region16: #{depth_loss.1} parent=11 // pred_fallthru
          _
        // Predicated region
        $region17: #{depth_loss.1} parent=11 // pred_check
          %p154 = pneg %p58
        $region18: #{depth_loss.1} parent=11 // pred_check_branch
          %156 = sbr.rel (%p154) target = $region20
        $region19: #{depth_loss.1} parent=11 // pred_region
          _
        $region20: #{depth_loss.1} parent=11 // pred_fallthru
          _
      $region12: #{depth_loss.1} parent=5 // pred_fallthru
        _
      %p157 = scmp.lt.s32.totalorder %s16, 4
      // Predicated region
      $region21: #{depth_loss.1} parent=5 // pred_check
        %p158 = pneg %p157
      $region22: #{depth_loss.1} parent=5 // pred_check_branch
        %160 = sbr.rel (%p158) target = $region24
      $region23: #{depth_loss.1} parent=5 // pred_region
        // Predicated region
        $region25: #{depth_loss.1} parent=23 // pred_check
          %p161 = pneg %p78
        $region26: #{depth_loss.1} parent=23 // pred_check_branch
          %163 = sbr.rel (%p161) target = $region28
        $region27: #{depth_loss.1} parent=23 // pred_region
          %s164 = sand.u32 %s68, 1
          %s165 = scalar_lea.sflag [#allocation3], %s164
          %s166 = sand.u32 %s68, 1
          %s167 = smul.addr %s166, 32
          %s168 = scalar_lea.vmem [#allocation2], %s167
          %s169 = smul.u32 2, %s16
          %s171 = ssub.s32 512, 512
          %172 = vsyncadd %s165, %s171
          %s173 = smul.addr %s169, 2
          %s174 = smul.addr %s173, 128
          %s175 = scalar_lea.hbm %s2, %s174
          %s176 = sshll.u32 %s168, 4
          %s177 = int_to_ptr.vmem [resolvable:$true] %s176
          %182 = dma.hbm_to_vmem [thread:$0]  %s175, 512, %s177, %s165, 128, 128, 8
        $region28: #{depth_loss.1} parent=23 // pred_fallthru
          _
        // Predicated region
        $region29: #{depth_loss.1} parent=23 // pred_check
          %p183 = pneg %p104
        $region30: #{depth_loss.1} parent=23 // pred_check_branch
          %185 = sbr.rel (%p183) target = $region32
        $region31: #{depth_loss.1} parent=23 // pred_region
          %s186 = sand.u32 %s94, 1
          %s187 = scalar_lea.sflag [#allocation5], %s186
          %s188 = sand.u32 %s94, 1
          %s189 = smul.addr %s188, 32
          %s190 = scalar_lea.vmem [#allocation4], %s189
          %s191 = smul.u32 2, %s16
          %s193 = ssub.s32 512, 512
          %194 = vsyncadd %s187, %s193
          %s195 = smul.addr %s191, 2
          %s196 = smul.addr %s195, 128
          %s197 = scalar_lea.hbm %s3, %s196
          %s198 = sshll.u32 %s190, 4
          %s199 = int_to_ptr.vmem [resolvable:$true] %s198
          %204 = dma.hbm_to_vmem [thread:$0]  %s197, 512, %s199, %s187, 128, 128, 8
        $region32: #{depth_loss.1} parent=23 // pred_fallthru
          _
      $region24: #{depth_loss.1} parent=5 // pred_fallthru
        _
      %p205 = scmp.le.s32.totalorder 1, %s16
      %p206 = scmp.lt.s32.totalorder %s16, 5
      %p207 = pnand %p205, %p206
      %p208 = pneg %p207
      // Predicated region
      $region33: #{depth_loss.1} parent=5 // pred_check
        _
      $region34: #{depth_loss.1} parent=5 // pred_check_branch
        %210 = sbr.rel (%p207) target = $region36
      $region35: #{depth_loss.1} parent=5 // pred_region
        %s211 = ssub.s32 %s16, 1
        %s212 = sand.u32 %s71, 1
        %s213 = scalar_lea.sflag [#allocation3], %s212
        %s214 = sand.u32 %s71, 1
        %s215 = smul.addr %s214, 32
        %s216 = scalar_lea.vmem [#allocation2], %s215
        // Predicated region
        $region37: #{depth_loss.1} parent=35 // pred_check
          %p217 = pneg %p84
        $region38: #{depth_loss.1} parent=35 // pred_check_branch
          %219 = sbr.rel (%p217) target = $region40
        $region39: #{depth_loss.1} parent=35 // pred_region
          %220 = dma.done %s213, 512
        $region40: #{depth_loss.1} parent=35 // pred_fallthru
          _
        %s221 = sand.u32 %s97, 1
        %s222 = scalar_lea.sflag [#allocation5], %s221
        %s223 = sand.u32 %s97, 1
        %s224 = smul.addr %s223, 32
        %s225 = scalar_lea.vmem [#allocation4], %s224
        // Predicated region
        $region41: #{depth_loss.1} parent=35 // pred_check
          %p226 = pneg %p110
        $region42: #{depth_loss.1} parent=35 // pred_check_branch
          %228 = sbr.rel (%p226) target = $region44
        $region43: #{depth_loss.1} parent=35 // pred_region
          %229 = dma.done %s222, 512
        $region44: #{depth_loss.1} parent=35 // pred_fallthru
          _
        %p230 = pneg %p37
        %p231 = pneg %p34
        %p232 = pneg %p58
        %p233 = pneg %p55
        %s234 = sand.u32 %s71, 1
        %s235 = scalar_lea.sflag [#allocation3], %s234
        %s236 = sand.u32 %s71, 1
        %s237 = smul.addr %s236, 32
        %s238 = scalar_lea.vmem [#allocation2], %s237
        %p239 = pneg %p84
        %p240 = pneg %p81
        %s241 = sand.u32 %s97, 1
        %s242 = scalar_lea.sflag [#allocation5], %s241
        %s243 = sand.u32 %s97, 1
        %s244 = smul.addr %s243, 32
        %s245 = scalar_lea.vmem [#allocation4], %s244
        %p246 = pneg %p110
        %p247 = pneg %p107
        %p248 = pneg %p136
        %p249 = pneg %p133
        %p250 = scmp.lt.s32.totalorder %s21, 3
        %s251 = scalar_select %p250, %s21, 3
        %s252 = smul.addr %s251, 4
        %s253 = smul.addr %s252, 8
        %s254 = scalar_lea.vmem %s4, %s253
        %s255 = smul.u32 2, %s21
        %s256 = smul.u32 2, %s21
        %p257 = scmp.lt.s32.totalorder %s21, 3
        %s258 = scalar_select %p257, %s21, 3
        %s259 = smul.addr %s258, 4
        %s260 = smul.addr %s259, 8
        %s261 = scalar_lea.vmem %s4, %s260
        %v263 = vld [vmem:[%s216] sm:$0xff]
        %v264 = vld [vmem:[%s216 + $0x8] sm:$0xff]
        %v265 = vld [vmem:[%s216 + $0x10] sm:$0xff]
        %v266 = vld [vmem:[%s216 + $0x18] sm:$0xff]
        %v267 = vld [vmem:[%s225] sm:$0xff]
        %v268 = vld [vmem:[%s225 + $0x8] sm:$0xff]
        %v269 = vld [vmem:[%s225 + $0x10] sm:$0xff]
        %v270 = vld [vmem:[%s225 + $0x18] sm:$0xff]
        %v271 = vld [vmem:[%s0] sm:$0xf]
        %v272 = vld [vmem:[%s0 + $0x4] sm:$0xf]
        %v273 = vld [vmem:[%s1] sm:$0xf]
        %v274 = vld [vmem:[%s1 + $0x4] sm:$0xf]
        %275 = vst [vmem:[%s261] sm:$0xff] 0.0
        %276 = vst [vmem:[%s261 + $0x8] sm:$0xff] 0.0
        %277 = vst [vmem:[%s261 + $0x10] sm:$0xff] 0.0
        %278 = vst [vmem:[%s261 + $0x18] sm:$0xff] 0.0
        %v279 = vsub.f32 %v267, %v263
        %v280 = vsub.f32 %v268, %v264
        %v281 = vsub.f32 %v269, %v265
        %v282 = vsub.f32 %v270, %v266
        %v283 = vand.u32 2147483647, %v279
        %v284 = vand.u32 2147483647, %v280
        %v285 = vand.u32 2147483647, %v281
        %v286 = vand.u32 2147483647, %v282
        %vm287 = vcmask 130048
        %v288 = vsel %vm287, %v283, 0.0
        %v289 = vsel %vm287, %v285, 0.0
        %v290 = vadd.f32 %v288, %v289
        %v291 = vsel %vm287, %v284, 0.0
        %v292 = vsel %vm287, %v286, 0.0
        %v293 = vadd.f32 %v291, %v292
        %v294 = vsel %vm287, %v290, 0.0
        %v295 = vsel %vm287, %v293, 0.0
        %v296 = vadd.f32 %v294, %v295
        %297 = vst.msk [vmem:[%s261] sm:$0xff] %vm287, %v296
        %302 = vrot.lane.b32.xlu0 %v279, 1
        %v303 = vpop.permute.xlu0 %302
        %304 = vrot.lane.b32.xlu0 %v280, 1
        %v305 = vpop.permute.xlu0 %304
        %306 = vrot.lane.b32.xlu0 %v281, 1
        %v307 = vpop.permute.xlu0 %306
        %308 = vrot.lane.b32.xlu0 %v282, 1
        %v309 = vpop.permute.xlu0 %308
        %v314 = vsub.f32 %v279, %v303
        %v315 = vsub.f32 %v280, %v305
        %v316 = vsub.f32 %v281, %v307
        %v317 = vsub.f32 %v282, %v309
        %v318 = vand.u32 2147483647, %v314
        %v319 = vand.u32 2147483647, %v315
        %v320 = vand.u32 2147483647, %v316
        %v321 = vand.u32 2147483647, %v317
        %vm322 = vcmask 130056
        %v323 = vsel %vm322, %v318, 0.0
        %v324 = vsel %vm322, %v320, 0.0
        %v325 = vadd.f32 %v323, %v324
        %v326 = vsel %vm322, %v319, 0.0
        %v327 = vsel %vm322, %v321, 0.0
        %v328 = vadd.f32 %v326, %v327
        %v329 = vsel %vm322, %v325, 0.0
        %v330 = vsel %vm322, %v328, 0.0
        %v331 = vadd.f32 %v329, %v330
        %333 = vrot.lane.b32.xlu0 %v331, 127
        %v334 = vpop.permute.xlu0 %333
        %s336 = scalar_lea.vmem %s261, 8
        %vm337 = vcmask 121856
        %338 = vst.msk [vmem:[%s336] sm:$0xff] %vm337, %v334
        %vm339 = vcmask 1040384
        %v340 = vrot.slane %v279, 7
        %v341 = vrot.slane %v280, 7
        %v342 = vsel %vm339, %v340, %v341
        %v343 = vrot.slane %v281, 7
        %v344 = vrot.slane %v282, 7
        %v345 = vsel %vm339, %v343, %v344
        %v350 = vsub.f32 %v279, %v340
        %v351 = vsub.f32 %v280, %v342
        %v352 = vsub.f32 %v281, %v343
        %v353 = vsub.f32 %v282, %v345
        %v354 = vand.u32 2147483647, %v350
        %v355 = vand.u32 2147483647, %v351
        %v356 = vand.u32 2147483647, %v352
        %v357 = vand.u32 2147483647, %v353
        %vm358 = vcmask 130049
        %v359 = vsel %vm358, %v354, 0.0
        %v360 = vsel %vm358, %v356, 0.0
        %v361 = vadd.f32 %v359, %v360
        %v362 = vsel %vm287, %v355, 0.0
        %v363 = vsel %vm287, %v357, 0.0
        %v364 = vadd.f32 %v362, %v363
        %vm367 = vcmask 1046528
        %v368 = vrot.slane %v361, 1
        %v369 = vrot.slane %v364, 1
        %v370 = vsel %vm367, %v368, %v369
        %v373 = vsel %vm287, %v370, 0.0
        %vm374 = vcmask 129024
        %v375 = vsel %vm374, %v369, 0.0
        %v376 = vadd.f32 %v373, %v375
        %v377 = vrot.slane %v376, 4
        %v378 = vadd.f32 %v376, %v377
        %v379 = vrot.slane %v378, 2
        %v380 = vadd.f32 %v378, %v379
        %v381 = vrot.slane %v380, 1
        %v382 = vadd.f32 %v380, %v381
        %s383 = scalar_lea.vmem %s261, 16
        %vm384 = vcmask 122880
        %385 = vst.msk [vmem:[%s383] sm:$0x1] %vm384, %v382
        %v386 = vpack.c.bf16 %v268, %v267
        %v387 = vpack.c.bf16 %v270, %v269
        %v388 = vpack.c.bf16 %v264, %v263
        %v389 = vpack.c.bf16 %v266, %v265
        %v390 = vmul.f32 %v267, %v267
        %v391 = vmul.f32 %v268, %v268
        %v392 = vmul.f32 %v269, %v269
        %v393 = vmul.f32 %v270, %v270
        %v394 = vpack.c.bf16 %v391, %v390
        %v395 = vpack.c.bf16 %v393, %v392
        %v396 = vmul.f32 %v263, %v263
        %v397 = vmul.f32 %v264, %v264
        %v398 = vmul.f32 %v265, %v265
        %v399 = vmul.f32 %v266, %v266
        %v400 = vpack.c.bf16 %v397, %v396
        %v401 = vpack.c.bf16 %v399, %v398
        %v402 = vmul.f32 %v267, %v263
        %v403 = vmul.f32 %v268, %v264
        %v404 = vmul.f32 %v269, %v265
        %v405 = vmul.f32 %v270, %v266
        %v406 = vpack.c.bf16 %v403, %v402
        %v407 = vpack.c.bf16 %v405, %v404
        %v410 = vunpack.c.l.b16 %v273
        %v411 = vunpack.c.l.b16 %v274
        %v412 = vpack.c.b16 %v411, %v410
        %v415 = vsel %vm287, %v386, 0
        %v418 = vsel %vm287, %v387, 0
        %420 = vmatprep.subr.bf16.mxu0 0
        %421 = vmatpush1.bf16.msra.mxu0 %v412
        %422 = vmatprep.subr.bf16.mxu0 0
        %423 = vmatpush1.bf16.msra.mxu0 0
        %424 = vmatprep.subr.bf16.mxu0 0
        %425 = vmatpush1.bf16.msra.mxu0 0
        %426 = vmatprep.subr.bf16.mxu0 0
        %427 = vmatpush1.bf16.msra.mxu0 0
        %428 = vmatprep.subr.bf16.mxu0 0
        %429 = vmatpush1.bf16.msra.mxu0 0
        %430 = vmatprep.subr.bf16.mxu0 0
        %431 = vmatpush1.bf16.msra.mxu0 0
        %432 = vmatprep.subr.bf16.mxu0 0
        %433 = vmatpush1.bf16.msra.mxu0 0
        %434 = vmatprep.subr.bf16.mxu0 0
        %435 = vmatpush1.bf16.msra.mxu0 0
        %436 = vmatprep.subr.bf16.mxu0 0
        %437 = vmatpush1.bf16.msra.mxu0 0
        %438 = vmatprep.subr.bf16.mxu0 0
        %439 = vmatpush1.bf16.msra.mxu0 0
        %440 = vmatprep.subr.bf16.mxu0 0
        %441 = vmatpush1.bf16.msra.mxu0 0
        %442 = vmatprep.subr.bf16.mxu0 0
        %443 = vmatpush1.bf16.msra.mxu0 0
        %444 = vmatprep.subr.bf16.mxu0 0
        %445 = vmatpush1.bf16.msra.mxu0 0
        %446 = vmatprep.subr.bf16.mxu0 0
        %447 = vmatpush1.bf16.msra.mxu0 0
        %448 = vmatprep.subr.bf16.mxu0 0
        %449 = vmatpush1.bf16.msra.mxu0 0
        %450 = vmatprep.subr.bf16.mxu0 0
        %451 = vmatpush1.bf16.msra.mxu0 0
        %452 = vmatprep.mubr.bf16.mxu0 0
        %453 = vmatmul.mubr.bf16.gmra.mrb[0].mxu0 %v415
        %v454 = vpop.f32.mrb[0].mxu0
        %v455 = vadd.f32 0.0, %v454
        %v456 = vpop.f32.mrb[0].mxu0
        %v457 = vpop.f32.mrb[0].mxu0
        %v458 = vadd.f32 0.0, %v457
        %v459 = vpop.f32.mrb[0].mxu0
        %460 = vmatprep.mubr.bf16.mxu0 0
        %461 = vmatmul.mubr.bf16.gmra.mrb[0].mxu0 %v418
        %v462 = vpop.f32.mrb[0].mxu0
        %v463 = vadd.f32 0.0, %v462
        %v464 = vpop.f32.mrb[0].mxu0
        %v465 = vpop.f32.mrb[0].mxu0
        %v466 = vadd.f32 0.0, %v465
        %v467 = vpop.f32.mrb[0].mxu0
        %468 = vdwg.mxu0
        %v469 = vpack.c.bf16 %v458, %v455
        %v470 = vpack.c.bf16 %v466, %v463
        %v472 = vsel %vm287, %v388, 0
        %v475 = vsel %vm287, %v389, 0
        %477 = vmatprep.subr.bf16.mxu0 0
        %478 = vmatpush1.bf16.msra.mxu0 %v412
        %479 = vmatprep.subr.bf16.mxu0 0
        %480 = vmatpush1.bf16.msra.mxu0 0
        %481 = vmatprep.subr.bf16.mxu0 0
        %482 = vmatpush1.bf16.msra.mxu0 0
        %483 = vmatprep.subr.bf16.mxu0 0
        %484 = vmatpush1.bf16.msra.mxu0 0
        %485 = vmatprep.subr.bf16.mxu0 0
        %486 = vmatpush1.bf16.msra.mxu0 0
        %487 = vmatprep.subr.bf16.mxu0 0
        %488 = vmatpush1.bf16.msra.mxu0 0
        %489 = vmatprep.subr.bf16.mxu0 0
        %490 = vmatpush1.bf16.msra.mxu0 0
        %491 = vmatprep.subr.bf16.mxu0 0
        %492 = vmatpush1.bf16.msra.mxu0 0
        %493 = vmatprep.subr.bf16.mxu0 0
        %494 = vmatpush1.bf16.msra.mxu0 0
        %495 = vmatprep.subr.bf16.mxu0 0
        %496 = vmatpush1.bf16.msra.mxu0 0
        %497 = vmatprep.subr.bf16.mxu0 0
        %498 = vmatpush1.bf16.msra.mxu0 0
        %499 = vmatprep.subr.bf16.mxu0 0
        %500 = vmatpush1.bf16.msra.mxu0 0
        %501 = vmatprep.subr.bf16.mxu0 0
        %502 = vmatpush1.bf16.msra.mxu0 0
        %503 = vmatprep.subr.bf16.mxu0 0
        %504 = vmatpush1.bf16.msra.mxu0 0
        %505 = vmatprep.subr.bf16.mxu0 0
        %506 = vmatpush1.bf16.msra.mxu0 0
        %507 = vmatprep.subr.bf16.mxu0 0
        %508 = vmatpush1.bf16.msra.mxu0 0
        %509 = vmatprep.mubr.bf16.mxu0 0
        %510 = vmatmul.mubr.bf16.gmra.mrb[0].mxu0 %v472
        %v511 = vpop.f32.mrb[0].mxu0
        %v512 = vadd.f32 0.0, %v511
        %v513 = vpop.f32.mrb[0].mxu0
        %v514 = vpop.f32.mrb[0].mxu0
        %v515 = vadd.f32 0.0, %v514
        %v516 = vpop.f32.mrb[0].mxu0
        %517 = vmatprep.mubr.bf16.mxu0 0
        %518 = vmatmul.mubr.bf16.gmra.mrb[0].mxu0 %v475
        %v519 = vpop.f32.mrb[0].mxu0
        %v520 = vadd.f32 0.0, %v519
        %v521 = vpop.f32.mrb[0].mxu0
        %v522 = vpop.f32.mrb[0].mxu0
        %v523 = vadd.f32 0.0, %v522
        %v524 = vpop.f32.mrb[0].mxu0
        %525 = vdwg.mxu0
        %v526 = vpack.c.bf16 %v515, %v512
        %v527 = vpack.c.bf16 %v523, %v520
        %v529 = vsel %vm287, %v394, 0
        %v532 = vsel %vm287, %v395, 0
        %534 = vmatprep.subr.bf16.mxu0 0
        %535 = vmatpush1.bf16.msra.mxu0 %v412
        %536 = vmatprep.subr.bf16.mxu0 0
        %537 = vmatpush1.bf16.msra.mxu0 0
        %538 = vmatprep.subr.bf16.mxu0 0
        %539 = vmatpush1.bf16.msra.mxu0 0
        %540 = vmatprep.subr.bf16.mxu0 0
        %541 = vmatpush1.bf16.msra.mxu0 0
        %542 = vmatprep.subr.bf16.mxu0 0
        %543 = vmatpush1.bf16.msra.mxu0 0
        %544 = vmatprep.subr.bf16.mxu0 0
        %545 = vmatpush1.bf16.msra.mxu0 0
        %546 = vmatprep.subr.bf16.mxu0 0
        %547 = vmatpush1.bf16.msra.mxu0 0
        %548 = vmatprep.subr.bf16.mxu0 0
        %549 = vmatpush1.bf16.msra.mxu0 0
        %550 = vmatprep.subr.bf16.mxu0 0
        %551 = vmatpush1.bf16.msra.mxu0 0
        %552 = vmatprep.subr.bf16.mxu0 0
        %553 = vmatpush1.bf16.msra.mxu0 0
        %554 = vmatprep.subr.bf16.mxu0 0
        %555 = vmatpush1.bf16.msra.mxu0 0
        %556 = vmatprep.subr.bf16.mxu0 0
        %557 = vmatpush1.bf16.msra.mxu0 0
        %558 = vmatprep.subr.bf16.mxu0 0
        %559 = vmatpush1.bf16.msra.mxu0 0
        %560 = vmatprep.subr.bf16.mxu0 0
        %561 = vmatpush1.bf16.msra.mxu0 0
        %562 = vmatprep.subr.bf16.mxu0 0
        %563 = vmatpush1.bf16.msra.mxu0 0
        %564 = vmatprep.subr.bf16.mxu0 0
        %565 = vmatpush1.bf16.msra.mxu0 0
        %566 = vmatprep.mubr.bf16.mxu0 0
        %567 = vmatmul.mubr.bf16.gmra.mrb[0].mxu0 %v529
        %v568 = vpop.f32.mrb[0].mxu0
        %v569 = vadd.f32 0.0, %v568
        %v570 = vpop.f32.mrb[0].mxu0
        %v571 = vpop.f32.mrb[0].mxu0
        %v572 = vadd.f32 0.0, %v571
        %v573 = vpop.f32.mrb[0].mxu0
        %574 = vmatprep.mubr.bf16.mxu0 0
        %575 = vmatmul.mubr.bf16.gmra.mrb[0].mxu0 %v532
        %v576 = vpop.f32.mrb[0].mxu0
        %v577 = vadd.f32 0.0, %v576
        %v578 = vpop.f32.mrb[0].mxu0
        %v579 = vpop.f32.mrb[0].mxu0
        %v580 = vadd.f32 0.0, %v579
        %v581 = vpop.f32.mrb[0].mxu0
        %582 = vdwg.mxu0
        %v583 = vpack.c.bf16 %v572, %v569
        %v584 = vpack.c.bf16 %v580, %v577
        %v586 = vsel %vm287, %v400, 0
        %v589 = vsel %vm287, %v401, 0
        %591 = vmatprep.subr.bf16.mxu0 0
        %592 = vmatpush1.bf16.msra.mxu0 %v412
        %593 = vmatprep.subr.bf16.mxu0 0
        %594 = vmatpush1.bf16.msra.mxu0 0
        %595 = vmatprep.subr.bf16.mxu0 0
        %596 = vmatpush1.bf16.msra.mxu0 0
        %597 = vmatprep.subr.bf16.mxu0 0
        %598 = vmatpush1.bf16.msra.mxu0 0
        %599 = vmatprep.subr.bf16.mxu0 0
        %600 = vmatpush1.bf16.msra.mxu0 0
        %601 = vmatprep.subr.bf16.mxu0 0
        %602 = vmatpush1.bf16.msra.mxu0 0
        %603 = vmatprep.subr.bf16.mxu0 0
        %604 = vmatpush1.bf16.msra.mxu0 0
        %605 = vmatprep.subr.bf16.mxu0 0
        %606 = vmatpush1.bf16.msra.mxu0 0
        %607 = vmatprep.subr.bf16.mxu0 0
        %608 = vmatpush1.bf16.msra.mxu0 0
        %609 = vmatprep.subr.bf16.mxu0 0
        %610 = vmatpush1.bf16.msra.mxu0 0
        %611 = vmatprep.subr.bf16.mxu0 0
        %612 = vmatpush1.bf16.msra.mxu0 0
        %613 = vmatprep.subr.bf16.mxu0 0
        %614 = vmatpush1.bf16.msra.mxu0 0
        %615 = vmatprep.subr.bf16.mxu0 0
        %616 = vmatpush1.bf16.msra.mxu0 0
        %617 = vmatprep.subr.bf16.mxu0 0
        %618 = vmatpush1.bf16.msra.mxu0 0
        %619 = vmatprep.subr.bf16.mxu0 0
        %620 = vmatpush1.bf16.msra.mxu0 0
        %621 = vmatprep.subr.bf16.mxu0 0
        %622 = vmatpush1.bf16.msra.mxu0 0
        %623 = vmatprep.mubr.bf16.mxu0 0
        %624 = vmatmul.mubr.bf16.gmra.mrb[0].mxu0 %v586
        %v625 = vpop.f32.mrb[0].mxu0
        %v626 = vadd.f32 0.0, %v625
        %v627 = vpop.f32.mrb[0].mxu0
        %v628 = vpop.f32.mrb[0].mxu0
        %v629 = vadd.f32 0.0, %v628
        %v630 = vpop.f32.mrb[0].mxu0
        %631 = vmatprep.mubr.bf16.mxu0 0
        %632 = vmatmul.mubr.bf16.gmra.mrb[0].mxu0 %v589
        %v633 = vpop.f32.mrb[0].mxu0
        %v634 = vadd.f32 0.0, %v633
        %v635 = vpop.f32.mrb[0].mxu0
        %v636 = vpop.f32.mrb[0].mxu0
        %v637 = vadd.f32 0.0, %v636
        %v638 = vpop.f32.mrb[0].mxu0
        %639 = vdwg.mxu0
        %v640 = vpack.c.bf16 %v629, %v626
        %v641 = vpack.c.bf16 %v637, %v634
        %v643 = vsel %vm287, %v406, 0
        %v646 = vsel %vm287, %v407, 0
        %648 = vmatprep.subr.bf16.mxu0 0
        %649 = vmatpush1.bf16.msra.mxu0 %v412
        %650 = vmatprep.subr.bf16.mxu0 0
        %651 = vmatpush1.bf16.msra.mxu0 0
        %652 = vmatprep.subr.bf16.mxu0 0
        %653 = vmatpush1.bf16.msra.mxu0 0
        %654 = vmatprep.subr.bf16.mxu0 0
        %655 = vmatpush1.bf16.msra.mxu0 0
        %656 = vmatprep.subr.bf16.mxu0 0
        %657 = vmatpush1.bf16.msra.mxu0 0
        %658 = vmatprep.subr.bf16.mxu0 0
        %659 = vmatpush1.bf16.msra.mxu0 0
        %660 = vmatprep.subr.bf16.mxu0 0
        %661 = vmatpush1.bf16.msra.mxu0 0
        %662 = vmatprep.subr.bf16.mxu0 0
        %663 = vmatpush1.bf16.msra.mxu0 0
        %664 = vmatprep.subr.bf16.mxu0 0
        %665 = vmatpush1.bf16.msra.mxu0 0
        %666 = vmatprep.subr.bf16.mxu0 0
        %667 = vmatpush1.bf16.msra.mxu0 0
        %668 = vmatprep.subr.bf16.mxu0 0
        %669 = vmatpush1.bf16.msra.mxu0 0
        %670 = vmatprep.subr.bf16.mxu0 0
        %671 = vmatpush1.bf16.msra.mxu0 0
        %672 = vmatprep.subr.bf16.mxu0 0
        %673 = vmatpush1.bf16.msra.mxu0 0
        %674 = vmatprep.subr.bf16.mxu0 0
        %675 = vmatpush1.bf16.msra.mxu0 0
        %676 = vmatprep.subr.bf16.mxu0 0
        %677 = vmatpush1.bf16.msra.mxu0 0
        %678 = vmatprep.subr.bf16.mxu0 0
        %679 = vmatpush1.bf16.msra.mxu0 0
        %680 = vmatprep.mubr.bf16.mxu0 0
        %681 = vmatmul.mubr.bf16.gmra.mrb[0].mxu0 %v643
        %v682 = vpop.f32.mrb[0].mxu0
        %v683 = vadd.f32 0.0, %v682
        %v684 = vpop.f32.mrb[0].mxu0
        %v685 = vpop.f32.mrb[0].mxu0
        %v686 = vadd.f32 0.0, %v685
        %v687 = vpop.f32.mrb[0].mxu0
        %688 = vmatprep.mubr.bf16.mxu0 0
        %689 = vmatmul.mubr.bf16.gmra.mrb[0].mxu0 %v646
        %v690 = vpop.f32.mrb[0].mxu0
        %v691 = vadd.f32 0.0, %v690
        %v692 = vpop.f32.mrb[0].mxu0
        %v693 = vpop.f32.mrb[0].mxu0
        %v694 = vadd.f32 0.0, %v693
        %v695 = vpop.f32.mrb[0].mxu0
        %696 = vdwg.mxu0
        %v697 = vpack.c.bf16 %v686, %v683
        %v698 = vpack.c.bf16 %v694, %v691
        %v701 = vunpack.c.l.b16 %v271
        %v702 = vunpack.c.l.b16 %v272
        %v703 = vpack.c.b16 %v702, %v701
        %v705 = vsel %vm287, %v703, 0
        %707 = vmatprep.subr.bf16.mxu0 0
        %708 = vmatpush1.bf16.msra.mxu0 %v469
        %709 = vmatprep.subr.bf16.mxu0 0
        %710 = vmatpush1.bf16.msra.mxu0 0
        %711 = vmatprep.subr.bf16.mxu0 0
        %712 = vmatpush1.bf16.msra.mxu0 0
        %713 = vmatprep.subr.bf16.mxu0 0
        %714 = vmatpush1.bf16.msra.mxu0 0
        %715 = vmatprep.subr.bf16.mxu0 0
        %716 = vmatpush1.bf16.msra.mxu0 0
        %717 = vmatprep.subr.bf16.mxu0 0
        %718 = vmatpush1.bf16.msra.mxu0 0
        %719 = vmatprep.subr.bf16.mxu0 0
        %720 = vmatpush1.bf16.msra.mxu0 0
        %721 = vmatprep.subr.bf16.mxu0 0
        %722 = vmatpush1.bf16.msra.mxu0 0
        %723 = vmatprep.subr.bf16.mxu0 0
        %724 = vmatpush1.bf16.msra.mxu0 0
        %725 = vmatprep.subr.bf16.mxu0 0
        %726 = vmatpush1.bf16.msra.mxu0 0
        %727 = vmatprep.subr.bf16.mxu0 0
        %728 = vmatpush1.bf16.msra.mxu0 0
        %729 = vmatprep.subr.bf16.mxu0 0
        %730 = vmatpush1.bf16.msra.mxu0 0
        %731 = vmatprep.subr.bf16.mxu0 0
        %732 = vmatpush1.bf16.msra.mxu0 0
        %733 = vmatprep.subr.bf16.mxu0 0
        %734 = vmatpush1.bf16.msra.mxu0 0
        %735 = vmatprep.subr.bf16.mxu0 0
        %736 = vmatpush1.bf16.msra.mxu0 0
        %737 = vmatprep.subr.bf16.mxu0 0
        %738 = vmatpush1.bf16.msra.mxu0 0
        %739 = vmatprep.mubr.bf16.mxu0 0
        %740 = vmatmul.mubr.bf16.gmra.mrb[0].mxu0 %v705
        %v741 = vpop.f32.mrb[0].mxu0
        %v742 = vadd.f32 0.0, %v741
        %v743 = vpop.f32.mrb[0].mxu0
        %v744 = vpop.f32.mrb[0].mxu0
        %v745 = vadd.f32 0.0, %v744
        %v746 = vpop.f32.mrb[0].mxu0
        %747 = vdwg.mxu0
        %748 = vmatprep.subr.bf16.mxu0 0
        %749 = vmatpush1.bf16.msra.mxu0 %v526
        %750 = vmatprep.subr.bf16.mxu0 0
        %751 = vmatpush1.bf16.msra.mxu0 0
        %752 = vmatprep.subr.bf16.mxu0 0
        %753 = vmatpush1.bf16.msra.mxu0 0
        %754 = vmatprep.subr.bf16.mxu0 0
        %755 = vmatpush1.bf16.msra.mxu0 0
        %756 = vmatprep.subr.bf16.mxu0 0
        %757 = vmatpush1.bf16.msra.mxu0 0
        %758 = vmatprep.subr.bf16.mxu0 0
        %759 = vmatpush1.bf16.msra.mxu0 0
        %760 = vmatprep.subr.bf16.mxu0 0
        %761 = vmatpush1.bf16.msra.mxu0 0
        %762 = vmatprep.subr.bf16.mxu0 0
        %763 = vmatpush1.bf16.msra.mxu0 0
        %764 = vmatprep.subr.bf16.mxu0 0
        %765 = vmatpush1.bf16.msra.mxu0 0
        %766 = vmatprep.subr.bf16.mxu0 0
        %767 = vmatpush1.bf16.msra.mxu0 0
        %768 = vmatprep.subr.bf16.mxu0 0
        %769 = vmatpush1.bf16.msra.mxu0 0
        %770 = vmatprep.subr.bf16.mxu0 0
        %771 = vmatpush1.bf16.msra.mxu0 0
        %772 = vmatprep.subr.bf16.mxu0 0
        %773 = vmatpush1.bf16.msra.mxu0 0
        %774 = vmatprep.subr.bf16.mxu0 0
        %775 = vmatpush1.bf16.msra.mxu0 0
        %776 = vmatprep.subr.bf16.mxu0 0
        %777 = vmatpush1.bf16.msra.mxu0 0
        %778 = vmatprep.subr.bf16.mxu0 0
        %779 = vmatpush1.bf16.msra.mxu0 0
        %780 = vmatprep.mubr.bf16.mxu0 0
        %781 = vmatmul.mubr.bf16.gmra.mrb[0].mxu0 %v705
        %v782 = vpop.f32.mrb[0].mxu0
        %v783 = vadd.f32 0.0, %v782
        %v784 = vpop.f32.mrb[0].mxu0
        %v785 = vpop.f32.mrb[0].mxu0
        %v786 = vadd.f32 0.0, %v785
        %v787 = vpop.f32.mrb[0].mxu0
        %788 = vdwg.mxu0
        %789 = vmatprep.subr.bf16.mxu0 0
        %790 = vmatpush1.bf16.msra.mxu0 %v583
        %791 = vmatprep.subr.bf16.mxu0 0
        %792 = vmatpush1.bf16.msra.mxu0 0
        %793 = vmatprep.subr.bf16.mxu0 0
        %794 = vmatpush1.bf16.msra.mxu0 0
        %795 = vmatprep.subr.bf16.mxu0 0
        %796 = vmatpush1.bf16.msra.mxu0 0
        %797 = vmatprep.subr.bf16.mxu0 0
        %798 = vmatpush1.bf16.msra.mxu0 0
        %799 = vmatprep.subr.bf16.mxu0 0
        %800 = vmatpush1.bf16.msra.mxu0 0
        %801 = vmatprep.subr.bf16.mxu0 0
        %802 = vmatpush1.bf16.msra.mxu0 0
        %803 = vmatprep.subr.bf16.mxu0 0
        %804 = vmatpush1.bf16.msra.mxu0 0
        %805 = vmatprep.subr.bf16.mxu0 0
        %806 = vmatpush1.bf16.msra.mxu0 0
        %807 = vmatprep.subr.bf16.mxu0 0
        %808 = vmatpush1.bf16.msra.mxu0 0
        %809 = vmatprep.subr.bf16.mxu0 0
        %810 = vmatpush1.bf16.msra.mxu0 0
        %811 = vmatprep.subr.bf16.mxu0 0
        %812 = vmatpush1.bf16.msra.mxu0 0
        %813 = vmatprep.subr.bf16.mxu0 0
        %814 = vmatpush1.bf16.msra.mxu0 0
        %815 = vmatprep.subr.bf16.mxu0 0
        %816 = vmatpush1.bf16.msra.mxu0 0
        %817 = vmatprep.subr.bf16.mxu0 0
        %818 = vmatpush1.bf16.msra.mxu0 0
        %819 = vmatprep.subr.bf16.mxu0 0
        %820 = vmatpush1.bf16.msra.mxu0 0
        %821 = vmatprep.mubr.bf16.mxu0 0
        %822 = vmatmul.mubr.bf16.gmra.mrb[0].mxu0 %v705
        %v823 = vpop.f32.mrb[0].mxu0
        %v824 = vadd.f32 0.0, %v823
        %v825 = vpop.f32.mrb[0].mxu0
        %v826 = vpop.f32.mrb[0].mxu0
        %v827 = vadd.f32 0.0, %v826
        %v828 = vpop.f32.mrb[0].mxu0
        %829 = vdwg.mxu0
        %830 = vmatprep.subr.bf16.mxu0 0
        %831 = vmatpush1.bf16.msra.mxu0 %v640
        %832 = vmatprep.subr.bf16.mxu0 0
        %833 = vmatpush1.bf16.msra.mxu0 0
        %834 = vmatprep.subr.bf16.mxu0 0
        %835 = vmatpush1.bf16.msra.mxu0 0
        %836 = vmatprep.subr.bf16.mxu0 0
        %837 = vmatpush1.bf16.msra.mxu0 0
        %838 = vmatprep.subr.bf16.mxu0 0
        %839 = vmatpush1.bf16.msra.mxu0 0
        %840 = vmatprep.subr.bf16.mxu0 0
        %841 = vmatpush1.bf16.msra.mxu0 0
        %842 = vmatprep.subr.bf16.mxu0 0
        %843 = vmatpush1.bf16.msra.mxu0 0
        %844 = vmatprep.subr.bf16.mxu0 0
        %845 = vmatpush1.bf16.msra.mxu0 0
        %846 = vmatprep.subr.bf16.mxu0 0
        %847 = vmatpush1.bf16.msra.mxu0 0
        %848 = vmatprep.subr.bf16.mxu0 0
        %849 = vmatpush1.bf16.msra.mxu0 0
        %850 = vmatprep.subr.bf16.mxu0 0
        %851 = vmatpush1.bf16.msra.mxu0 0
        %852 = vmatprep.subr.bf16.mxu0 0
        %853 = vmatpush1.bf16.msra.mxu0 0
        %854 = vmatprep.subr.bf16.mxu0 0
        %855 = vmatpush1.bf16.msra.mxu0 0
        %856 = vmatprep.subr.bf16.mxu0 0
        %857 = vmatpush1.bf16.msra.mxu0 0
        %858 = vmatprep.subr.bf16.mxu0 0
        %859 = vmatpush1.bf16.msra.mxu0 0
        %860 = vmatprep.subr.bf16.mxu0 0
        %861 = vmatpush1.bf16.msra.mxu0 0
        %862 = vmatprep.mubr.bf16.mxu0 0
        %863 = vmatmul.mubr.bf16.gmra.mrb[0].mxu0 %v705
        %v864 = vpop.f32.mrb[0].mxu0
        %v865 = vadd.f32 0.0, %v864
        %v866 = vpop.f32.mrb[0].mxu0
        %v867 = vpop.f32.mrb[0].mxu0
        %v868 = vadd.f32 0.0, %v867
        %v869 = vpop.f32.mrb[0].mxu0
        %870 = vdwg.mxu0
        %871 = vmatprep.subr.bf16.mxu0 0
        %872 = vmatpush1.bf16.msra.mxu0 %v697
        %873 = vmatprep.subr.bf16.mxu0 0
        %874 = vmatpush1.bf16.msra.mxu0 0
        %875 = vmatprep.subr.bf16.mxu0 0
        %876 = vmatpush1.bf16.msra.mxu0 0
        %877 = vmatprep.subr.bf16.mxu0 0
        %878 = vmatpush1.bf16.msra.mxu0 0
        %879 = vmatprep.subr.bf16.mxu0 0
        %880 = vmatpush1.bf16.msra.mxu0 0
        %881 = vmatprep.subr.bf16.mxu0 0
        %882 = vmatpush1.bf16.msra.mxu0 0
        %883 = vmatprep.subr.bf16.mxu0 0
        %884 = vmatpush1.bf16.msra.mxu0 0
        %885 = vmatprep.subr.bf16.mxu0 0
        %886 = vmatpush1.bf16.msra.mxu0 0
        %887 = vmatprep.subr.bf16.mxu0 0
        %888 = vmatpush1.bf16.msra.mxu0 0
        %889 = vmatprep.subr.bf16.mxu0 0
        %890 = vmatpush1.bf16.msra.mxu0 0
        %891 = vmatprep.subr.bf16.mxu0 0
        %892 = vmatpush1.bf16.msra.mxu0 0
        %893 = vmatprep.subr.bf16.mxu0 0
        %894 = vmatpush1.bf16.msra.mxu0 0
        %895 = vmatprep.subr.bf16.mxu0 0
        %896 = vmatpush1.bf16.msra.mxu0 0
        %897 = vmatprep.subr.bf16.mxu0 0
        %898 = vmatpush1.bf16.msra.mxu0 0
        %899 = vmatprep.subr.bf16.mxu0 0
        %900 = vmatpush1.bf16.msra.mxu0 0
        %901 = vmatprep.subr.bf16.mxu0 0
        %902 = vmatpush1.bf16.msra.mxu0 0
        %903 = vmatprep.mubr.bf16.mxu0 0
        %904 = vmatmul.mubr.bf16.gmra.mrb[0].mxu0 %v705
        %v905 = vpop.f32.mrb[0].mxu0
        %v906 = vadd.f32 0.0, %v905
        %v907 = vpop.f32.mrb[0].mxu0
        %v908 = vpop.f32.mrb[0].mxu0
        %v909 = vadd.f32 0.0, %v908
        %v910 = vpop.f32.mrb[0].mxu0
        %911 = vdwg.mxu0
        %v912 = vmul.f32 %v742, %v783
        %v913 = vmul.f32 %v745, %v786
        %v914 = vmul.f32 %v742, %v742
        %v915 = vmul.f32 %v745, %v745
        %v916 = vmul.f32 %v783, %v783
        %v917 = vmul.f32 %v786, %v786
        %v918 = vmul.f32 %v912, 2.0
        %v919 = vmul.f32 %v913, 2.0
        %v920 = vadd.f32 %v918, 0.0001
        %v921 = vadd.f32 %v919, 0.0001
        %v922 = vsub.f32 %v906, %v912
        %v923 = vsub.f32 %v909, %v913
        %v924 = vmul.f32 %v922, 2.0
        %v925 = vmul.f32 %v923, 2.0
        %v926 = vadd.f32 %v924, 0.0009
        %v927 = vadd.f32 %v925, 0.0009
        %v928 = vmul.f32 %v920, %v926
        %v929 = vmul.f32 %v921, %v927
        %v930 = vadd.f32 %v914, %v916
        %v931 = vadd.f32 %v915, %v917
        %v932 = vadd.f32 %v930, 0.0001
        %v933 = vadd.f32 %v931, 0.0001
        %v934 = vsub.f32 %v824, %v914
        %v935 = vsub.f32 %v827, %v915
        %v936 = vsub.f32 %v865, %v916
        %v937 = vsub.f32 %v868, %v917
        %v938 = vadd.f32 %v934, %v936
        %v939 = vadd.f32 %v935, %v937
        %v940 = vadd.f32 %v938, 0.0009
        %v941 = vadd.f32 %v939, 0.0009
        %v942 = vmul.f32 %v932, %v940
        %v943 = vmul.f32 %v933, %v941
        %v944 = vrcp.pop %v942
        %v945 = vrcp.pop %v943
        %v946 = vmul.f32 %v928, %v944
        %v947 = vmul.f32 %v929, %v945
        %v948 = vsel %vm287, %v946, 0.0
        %v949 = vsel %vm287, %v947, 0.0
        %v950 = vadd.f32 %v948, %v949
        %951 = vmatprep.subr.bf16.mxu0 0
        %952 = vmatpush1.bf16.msra.mxu0 %v470
        %953 = vmatprep.subr.bf16.mxu0 0
        %954 = vmatpush1.bf16.msra.mxu0 0
        %955 = vmatprep.subr.bf16.mxu0 0
        %956 = vmatpush1.bf16.msra.mxu0 0
        %957 = vmatprep.subr.bf16.mxu0 0
        %958 = vmatpush1.bf16.msra.mxu0 0
        %959 = vmatprep.subr.bf16.mxu0 0
        %960 = vmatpush1.bf16.msra.mxu0 0
        %961 = vmatprep.subr.bf16.mxu0 0
        %962 = vmatpush1.bf16.msra.mxu0 0
        %963 = vmatprep.subr.bf16.mxu0 0
        %964 = vmatpush1.bf16.msra.mxu0 0
        %965 = vmatprep.subr.bf16.mxu0 0
        %966 = vmatpush1.bf16.msra.mxu0 0
        %967 = vmatprep.subr.bf16.mxu0 0
        %968 = vmatpush1.bf16.msra.mxu0 0
        %969 = vmatprep.subr.bf16.mxu0 0
        %970 = vmatpush1.bf16.msra.mxu0 0
        %971 = vmatprep.subr.bf16.mxu0 0
        %972 = vmatpush1.bf16.msra.mxu0 0
        %973 = vmatprep.subr.bf16.mxu0 0
        %974 = vmatpush1.bf16.msra.mxu0 0
        %975 = vmatprep.subr.bf16.mxu0 0
        %976 = vmatpush1.bf16.msra.mxu0 0
        %977 = vmatprep.subr.bf16.mxu0 0
        %978 = vmatpush1.bf16.msra.mxu0 0
        %979 = vmatprep.subr.bf16.mxu0 0
        %980 = vmatpush1.bf16.msra.mxu0 0
        %981 = vmatprep.subr.bf16.mxu0 0
        %982 = vmatpush1.bf16.msra.mxu0 0
        %983 = vmatprep.mubr.bf16.mxu0 0
        %984 = vmatmul.mubr.bf16.gmra.mrb[0].mxu0 %v705
        %v985 = vpop.f32.mrb[0].mxu0
        %v986 = vadd.f32 0.0, %v985
        %v987 = vpop.f32.mrb[0].mxu0
        %v988 = vpop.f32.mrb[0].mxu0
        %v989 = vadd.f32 0.0, %v988
        %v990 = vpop.f32.mrb[0].mxu0
        %991 = vdwg.mxu0
        %992 = vmatprep.subr.bf16.mxu0 0
        %993 = vmatpush1.bf16.msra.mxu0 %v527
        %994 = vmatprep.subr.bf16.mxu0 0
        %995 = vmatpush1.bf16.msra.mxu0 0
        %996 = vmatprep.subr.bf16.mxu0 0
        %997 = vmatpush1.bf16.msra.mxu0 0
        %998 = vmatprep.subr.bf16.mxu0 0
        %999 = vmatpush1.bf16.msra.mxu0 0
        %1000 = vmatprep.subr.bf16.mxu0 0
        %1001 = vmatpush1.bf16.msra.mxu0 0
        %1002 = vmatprep.subr.bf16.mxu0 0
        %1003 = vmatpush1.bf16.msra.mxu0 0
        %1004 = vmatprep.subr.bf16.mxu0 0
        %1005 = vmatpush1.bf16.msra.mxu0 0
        %1006 = vmatprep.subr.bf16.mxu0 0
        %1007 = vmatpush1.bf16.msra.mxu0 0
        %1008 = vmatprep.subr.bf16.mxu0 0
        %1009 = vmatpush1.bf16.msra.mxu0 0
        %1010 = vmatprep.subr.bf16.mxu0 0
        %1011 = vmatpush1.bf16.msra.mxu0 0
        %1012 = vmatprep.subr.bf16.mxu0 0
        %1013 = vmatpush1.bf16.msra.mxu0 0
        %1014 = vmatprep.subr.bf16.mxu0 0
        %1015 = vmatpush1.bf16.msra.mxu0 0
        %1016 = vmatprep.subr.bf16.mxu0 0
        %1017 = vmatpush1.bf16.msra.mxu0 0
        %1018 = vmatprep.subr.bf16.mxu0 0
        %1019 = vmatpush1.bf16.msra.mxu0 0
        %1020 = vmatprep.subr.bf16.mxu0 0
        %1021 = vmatpush1.bf16.msra.mxu0 0
        %1022 = vmatprep.subr.bf16.mxu0 0
        %1023 = vmatpush1.bf16.msra.mxu0 0
        %1024 = vmatprep.mubr.bf16.mxu0 0
        %1025 = vmatmul.mubr.bf16.gmra.mrb[0].mxu0 %v705
        %v1026 = vpop.f32.mrb[0].mxu0
        %v1027 = vadd.f32 0.0, %v1026
        %v1028 = vpop.f32.mrb[0].mxu0
        %v1029 = vpop.f32.mrb[0].mxu0
        %v1030 = vadd.f32 0.0, %v1029
        %v1031 = vpop.f32.mrb[0].mxu0
        %1032 = vdwg.mxu0
        %1033 = vmatprep.subr.bf16.mxu0 0
        %1034 = vmatpush1.bf16.msra.mxu0 %v584
        %1035 = vmatprep.subr.bf16.mxu0 0
        %1036 = vmatpush1.bf16.msra.mxu0 0
        %1037 = vmatprep.subr.bf16.mxu0 0
        %1038 = vmatpush1.bf16.msra.mxu0 0
        %1039 = vmatprep.subr.bf16.mxu0 0
        %1040 = vmatpush1.bf16.msra.mxu0 0
        %1041 = vmatprep.subr.bf16.mxu0 0
        %1042 = vmatpush1.bf16.msra.mxu0 0
        %1043 = vmatprep.subr.bf16.mxu0 0
        %1044 = vmatpush1.bf16.msra.mxu0 0
        %1045 = vmatprep.subr.bf16.mxu0 0
        %1046 = vmatpush1.bf16.msra.mxu0 0
        %1047 = vmatprep.subr.bf16.mxu0 0
        %1048 = vmatpush1.bf16.msra.mxu0 0
        %1049 = vmatprep.subr.bf16.mxu0 0
        %1050 = vmatpush1.bf16.msra.mxu0 0
        %1051 = vmatprep.subr.bf16.mxu0 0
        %1052 = vmatpush1.bf16.msra.mxu0 0
        %1053 = vmatprep.subr.bf16.mxu0 0
        %1054 = vmatpush1.bf16.msra.mxu0 0
        %1055 = vmatprep.subr.bf16.mxu0 0
        %1056 = vmatpush1.bf16.msra.mxu0 0
        %1057 = vmatprep.subr.bf16.mxu0 0
        %1058 = vmatpush1.bf16.msra.mxu0 0
        %1059 = vmatprep.subr.bf16.mxu0 0
        %1060 = vmatpush1.bf16.msra.mxu0 0
        %1061 = vmatprep.subr.bf16.mxu0 0
        %1062 = vmatpush1.bf16.msra.mxu0 0
        %1063 = vmatprep.subr.bf16.mxu0 0
        %1064 = vmatpush1.bf16.msra.mxu0 0
        %1065 = vmatprep.mubr.bf16.mxu0 0
        %1066 = vmatmul.mubr.bf16.gmra.mrb[0].mxu0 %v705
        %v1067 = vpop.f32.mrb[0].mxu0
        %v1068 = vadd.f32 0.0, %v1067
        %v1069 = vpop.f32.mrb[0].mxu0
        %v1070 = vpop.f32.mrb[0].mxu0
        %v1071 = vadd.f32 0.0, %v1070
        %v1072 = vpop.f32.mrb[0].mxu0
        %1073 = vdwg.mxu0
        %1074 = vmatprep.subr.bf16.mxu0 0
        %1075 = vmatpush1.bf16.msra.mxu0 %v641
        %1076 = vmatprep.subr.bf16.mxu0 0
        %1077 = vmatpush1.bf16.msra.mxu0 0
        %1078 = vmatprep.subr.bf16.mxu0 0
        %1079 = vmatpush1.bf16.msra.mxu0 0
        %1080 = vmatprep.subr.bf16.mxu0 0
        %1081 = vmatpush1.bf16.msra.mxu0 0
        %1082 = vmatprep.subr.bf16.mxu0 0
        %1083 = vmatpush1.bf16.msra.mxu0 0
        %1084 = vmatprep.subr.bf16.mxu0 0
        %1085 = vmatpush1.bf16.msra.mxu0 0
        %1086 = vmatprep.subr.bf16.mxu0 0
        %1087 = vmatpush1.bf16.msra.mxu0 0
        %1088 = vmatprep.subr.bf16.mxu0 0
        %1089 = vmatpush1.bf16.msra.mxu0 0
        %1090 = vmatprep.subr.bf16.mxu0 0
        %1091 = vmatpush1.bf16.msra.mxu0 0
        %1092 = vmatprep.subr.bf16.mxu0 0
        %1093 = vmatpush1.bf16.msra.mxu0 0
        %1094 = vmatprep.subr.bf16.mxu0 0
        %1095 = vmatpush1.bf16.msra.mxu0 0
        %1096 = vmatprep.subr.bf16.mxu0 0
        %1097 = vmatpush1.bf16.msra.mxu0 0
        %1098 = vmatprep.subr.bf16.mxu0 0
        %1099 = vmatpush1.bf16.msra.mxu0 0
        %1100 = vmatprep.subr.bf16.mxu0 0
        %1101 = vmatpush1.bf16.msra.mxu0 0
        %1102 = vmatprep.subr.bf16.mxu0 0
        %1103 = vmatpush1.bf16.msra.mxu0 0
        %1104 = vmatprep.subr.bf16.mxu0 0
        %1105 = vmatpush1.bf16.msra.mxu0 0
        %1106 = vmatprep.mubr.bf16.mxu0 0
        %1107 = vmatmul.mubr.bf16.gmra.mrb[0].mxu0 %v705
        %v1108 = vpop.f32.mrb[0].mxu0
        %v1109 = vadd.f32 0.0, %v1108
        %v1110 = vpop.f32.mrb[0].mxu0
        %v1111 = vpop.f32.mrb[0].mxu0
        %v1112 = vadd.f32 0.0, %v1111
        %v1113 = vpop.f32.mrb[0].mxu0
        %1114 = vdwg.mxu0
        %1115 = vmatprep.subr.bf16.mxu0 0
        %1116 = vmatpush1.bf16.msra.mxu0 %v698
        %1117 = vmatprep.subr.bf16.mxu0 0
        %1118 = vmatpush1.bf16.msra.mxu0 0
        %1119 = vmatprep.subr.bf16.mxu0 0
        %1120 = vmatpush1.bf16.msra.mxu0 0
        %1121 = vmatprep.subr.bf16.mxu0 0
        %1122 = vmatpush1.bf16.msra.mxu0 0
        %1123 = vmatprep.subr.bf16.mxu0 0
        %1124 = vmatpush1.bf16.msra.mxu0 0
        %1125 = vmatprep.subr.bf16.mxu0 0
        %1126 = vmatpush1.bf16.msra.mxu0 0
        %1127 = vmatprep.subr.bf16.mxu0 0
        %1128 = vmatpush1.bf16.msra.mxu0 0
        %1129 = vmatprep.subr.bf16.mxu0 0
        %1130 = vmatpush1.bf16.msra.mxu0 0
        %1131 = vmatprep.subr.bf16.mxu0 0
        %1132 = vmatpush1.bf16.msra.mxu0 0
        %1133 = vmatprep.subr.bf16.mxu0 0
        %1134 = vmatpush1.bf16.msra.mxu0 0
        %1135 = vmatprep.subr.bf16.mxu0 0
        %1136 = vmatpush1.bf16.msra.mxu0 0
        %1137 = vmatprep.subr.bf16.mxu0 0
        %1138 = vmatpush1.bf16.msra.mxu0 0
        %1139 = vmatprep.subr.bf16.mxu0 0
        %1140 = vmatpush1.bf16.msra.mxu0 0
        %1141 = vmatprep.subr.bf16.mxu0 0
        %1142 = vmatpush1.bf16.msra.mxu0 0
        %1143 = vmatprep.subr.bf16.mxu0 0
        %1144 = vmatpush1.bf16.msra.mxu0 0
        %1145 = vmatprep.subr.bf16.mxu0 0
        %1146 = vmatpush1.bf16.msra.mxu0 0
        %1147 = vmatprep.mubr.bf16.mxu0 0
        %1148 = vmatmul.mubr.bf16.gmra.mrb[0].mxu0 %v705
        %v1149 = vpop.f32.mrb[0].mxu0
        %v1150 = vadd.f32 0.0, %v1149
        %v1151 = vpop.f32.mrb[0].mxu0
        %v1152 = vpop.f32.mrb[0].mxu0
        %v1153 = vadd.f32 0.0, %v1152
        %v1154 = vpop.f32.mrb[0].mxu0
        %1155 = vdwg.mxu0
        %v1156 = vmul.f32 %v986, %v1027
        %v1157 = vmul.f32 %v989, %v1030
        %v1158 = vmul.f32 %v986, %v986
        %v1159 = vmul.f32 %v989, %v989
        %v1160 = vmul.f32 %v1027, %v1027
        %v1161 = vmul.f32 %v1030, %v1030
        %v1162 = vmul.f32 %v1156, 2.0
        %v1163 = vmul.f32 %v1157, 2.0
        %v1164 = vadd.f32 %v1162, 0.0001
        %v1165 = vadd.f32 %v1163, 0.0001
        %v1166 = vsub.f32 %v1150, %v1156
        %v1167 = vsub.f32 %v1153, %v1157
        %v1168 = vmul.f32 %v1166, 2.0
        %v1169 = vmul.f32 %v1167, 2.0
        %v1170 = vadd.f32 %v1168, 0.0009
        %v1171 = vadd.f32 %v1169, 0.0009
        %v1172 = vmul.f32 %v1164, %v1170
        %v1173 = vmul.f32 %v1165, %v1171
        %v1174 = vadd.f32 %v1158, %v1160
        %v1175 = vadd.f32 %v1159, %v1161
        %v1176 = vadd.f32 %v1174, 0.0001
        %v1177 = vadd.f32 %v1175, 0.0001
        %v1178 = vsub.f32 %v1068, %v1158
        %v1179 = vsub.f32 %v1071, %v1159
        %v1180 = vsub.f32 %v1109, %v1160
        %v1181 = vsub.f32 %v1112, %v1161
        %v1182 = vadd.f32 %v1178, %v1180
        %v1183 = vadd.f32 %v1179, %v1181
        %v1184 = vadd.f32 %v1182, 0.0009
        %v1185 = vadd.f32 %v1183, 0.0009
        %v1186 = vmul.f32 %v1176, %v1184
        %v1187 = vmul.f32 %v1177, %v1185
        %v1188 = vrcp.pop %v1186
        %v1189 = vrcp.pop %v1187
        %v1190 = vmul.f32 %v1172, %v1188
        %v1191 = vmul.f32 %v1173, %v1189
        %v1192 = vsel %vm287, %v1190, 0.0
        %v1193 = vsel %vm287, %v1191, 0.0
        %v1194 = vadd.f32 %v1192, %v1193
        %v1195 = vadd.f32 %v950, %v1194
        %s1196 = scalar_lea.vmem %s261, 24
        %1197 = vst.msk [vmem:[%s1196] sm:$0xff] %vm287, %v1195
        %p1198 = scmp.lt.s32.totalorder %s21, 3
        %s1199 = scalar_select %p1198, %s21, 3
        %s1200 = smul.addr %s1199, 4
        %s1201 = smul.addr %s1200, 8
        %s1202 = scalar_lea.vmem %s4, %s1201
        // Predicated region
        $region45: #{depth_loss.1} parent=35 // pred_check
          %p1203 = pneg %p133
        $region46: #{depth_loss.1} parent=35 // pred_check_branch
          %1205 = sbr.rel (%p1203) target = $region48
        $region47: #{depth_loss.1} parent=35 // pred_region
          _
        $region48: #{depth_loss.1} parent=35 // pred_fallthru
          _
      $region36: #{depth_loss.1} parent=5 // pred_fallthru
        _
      %p1206 = scmp.le.s32.totalorder 2, %s16
      // Predicated region
      $region49: #{depth_loss.1} parent=5 // pred_check
        %p1207 = pneg %p1206
      $region50: #{depth_loss.1} parent=5 // pred_check_branch
        %1209 = sbr.rel (%p1207) target = $region52
      $region51: #{depth_loss.1} parent=5 // pred_region
        %s1210 = ssub.s32 %s16, 2
        // Predicated region
        $region53: #{depth_loss.1} parent=51 // pred_check
          %p1211 = pneg %p139
        $region54: #{depth_loss.1} parent=51 // pred_check_branch
          %1213 = sbr.rel (%p1211) target = $region56
        $region55: #{depth_loss.1} parent=51 // pred_region
          %p1214 = scmp.lt.s32.totalorder %s22, 3
          %s1215 = scalar_select %p1214, %s22, 3
          %s1216 = smul.addr %s1215, 4
          %s1217 = smul.addr %s1216, 8
          %s1218 = scalar_lea.vmem %s4, %s1217
        $region56: #{depth_loss.1} parent=51 // pred_fallthru
          _
      $region52: #{depth_loss.1} parent=5 // pred_fallthru
        _
    $region6: #{depth_loss.1} parent=1 // loop_footer
      %s20 = sadd.s32 1, %s16
    $region7: #{depth_loss.1} parent=1 // loop_footer_branch
      %15 = sbr.rel target = $region3
    $region8: #{depth_loss.1} parent=1 // loop_exit
      _
    %1219 = vsyncpa [#allocation3], 1
    %s1220 = scalar_lea.sflag [#allocation3], 1
    %1221 = vsyncpa %s1220, 1
    %1222 = vsyncpa [#allocation5], 1
    %s1223 = scalar_lea.sflag [#allocation5], 1
    %1224 = vsyncpa %s1223, 1

</llo_original>
